<compile_context>
chip_gen: v7x
topology: tpu7x:2x2x1
jax: 0.10.0
libtpu: 0.0.40
codegen_flags: <defaults>
</compile_context>

<pallas_src>
import functools

import jax
import jax.numpy as jnp
from jax.experimental import pallas as pl
from jax.experimental.pallas import tpu as pltpu


# -----------------------------------------------------------------------------
# Kernel
# -----------------------------------------------------------------------------
def _strinr_kernel(x_ref, wA_ref, bA_ref, wB_ref, bB_ref, wR_ref, bR_ref,
                   cw_ref, cb_ref, g_ref, beta_ref, o_ref, *,
                   d_real, s_real, dot_dtype):
    bt, S, Dp = x_ref.shape            # S = padded per-tile sequence extent
    N = bt * S

    x3 = x_ref[...].astype(jnp.float32)
    x2 = x3.reshape(N, Dp)             # tall M so every dot fills the MXU

    inv_d = jnp.float32(1.0 / d_real)

    def matmul(h, wm):
        # dot operands optionally bf16; accumulation always f32.
        return jnp.dot(h.astype(dot_dtype), wm.astype(dot_dtype),
                       preferred_element_type=jnp.float32)

    def layernorm(h, i):
        # Invariant (load-bearing): every pad lane is exactly zero all the way
        # through the kernel (zero-padded x, weights, biases, conv params,
        # gamma, beta), so unmasked sums over Dp lanes equal sums over the
        # real d_real lanes.  gamma/beta pad lanes are zero, so pad lanes stay
        # zero after the affine as well.  No iota / mask / select needed.
        mu = jnp.sum(h, axis=-1, keepdims=True) * inv_d
        var = jnp.sum(h * h, axis=-1, keepdims=True) * inv_d - mu * mu
        return (h - mu) * jax.lax.rsqrt(var + 1e-5) * g_ref[i] + beta_ref[i]

    # ---------------- first half ----------------
    # Fused matmul from x: [iINR_f | egu_W1 | egu_W2] -> (N, 3*Dp).
    fA = matmul(x2, wA_ref[...]) + bA_ref[...]
    xa = fA[:, :Dp]
    # Consume the EGU gate/value slices immediately so fA (3 activation tiles)
    # dies early -> smaller peak live VMEM (matters on v7x's 64 MiB).
    egu = fA[:, Dp:2 * Dp] * jax.nn.sigmoid(fA[:, 2 * Dp:3 * Dp])

    x_out = matmul(jnp.sin(xa), wR_ref[0]) + bR_ref[0]        # iINR_f -> oINR_f
    egu = jnp.sin(matmul(egu, wR_ref[2]) + bR_ref[2])         # EGU -> eguINR

    # SpatialAKConv: depthwise kernel-3 "same" conv along the sequence axis.
    # Shifted neighbours via XLU sublane rolls on the flat (N, Dp) tile; only
    # the per-sequence boundary rows are masked so batch rows stay isolated
    # and the last *real* row sees the reference's zero padding (also correct
    # when S is padded to a multiple of 8).
    seq_pos = jax.lax.broadcasted_iota(jnp.int32, (N, 1), 0) % S
    x_prev = jnp.where(seq_pos != 0,
                       pltpu.roll(x2, shift=1, axis=0), 0.0)
    x_next = jnp.where(seq_pos != (s_real - 1),
                       pltpu.roll(x2, shift=N - 1, axis=0), 0.0)
    sak = x_prev * cw_ref[0] + x2 * cw_ref[1] + x_next * cw_ref[2] + cb_ref[0]
    sak = jnp.sin(matmul(sak, wR_ref[1]) + bR_ref[1])         # sAK -> sAKINR

    acc = layernorm(x2, 0) + x_out + sak + egu                # norm1 residual
    y = layernorm(acc, 1)                                     # norm2

    # ---------------- second half ----------------
    # Fused matmul from y: [iINR_b | random] -> (N, 2*Dp).
    fB = matmul(y, wB_ref[...]) + bB_ref[...]
    y_out = matmul(jnp.sin(fB[:, :Dp]), wR_ref[3]) + bR_ref[3]       # iINR_b -> oINR_b
    rnd = jnp.sin(matmul(fB[:, Dp:2 * Dp], wR_ref[4]) + bR_ref[4])   # random -> randomINR

    out = layernorm(y + y_out + rnd, 2)                       # norm3
    o_ref[...] = out.reshape(bt, S, Dp).astype(o_ref.dtype)


# -----------------------------------------------------------------------------
# Wrapper helpers
# -----------------------------------------------------------------------------
def _round_up(n, m):
    return ((n + m - 1) // m) * m


def _largest_divisor_leq(n, cap):
    cap = max(1, min(n, cap))
    for d in range(cap, 0, -1):
        if n % d == 0:
            return d
    return 1


def _vmem_budget_bytes():
    """~85% of the chip's per-core VMEM (v5e/v6e: 128 MiB, v7x: 64 MiB)."""
    try:
        info = pltpu.get_tpu_info()
        cap = int(getattr(info, "vmem_capacity_bytes", 64 << 20))
    except Exception:
        cap = 64 << 20          # conservative fallback (v7x per-TensorCore VMEM)
    return int(cap * 0.85)


def _pick_batch_tile(B, Sp, Dp):
    """Batch-tile heuristic:
       - x tile <= ~2 MiB f32 (VMEM headroom on the 64 MiB part),
       - at least 2 grid steps whenever B >= 2 (v7x 2-core sharding + DMA
         overlap; per-step overhead is only ~0.35 us),
       - bt*Sp >= ~256 rows where possible so the fused dots fill the MXU."""
    bt_vmem = max(1, (2 << 20) // (Sp * Dp * 4))
    bt_mxu = max(1, -(-256 // Sp))                 # ceil(256 / Sp)
    bt_steps = max(1, B // 8) if B >= 8 else 1     # aim for ~8 steps on big B
    bt = min(bt_vmem, max(bt_mxu, bt_steps))
    if B >= 2:
        bt = min(bt, B // 2)                       # guarantee >= 2 grid steps
    return _largest_divisor_leq(B, max(1, bt))


def prepare_strinr_params(w, b, cw, cb, g, beta, *, dot_dtype=jnp.float32):
    """One-time (init-time) parameter packing for the fused kernel.

    w: (10, D, D); b: (10, D) in application order
       [iINR_f, oINR_f, sAKINR, egu_W1, egu_W2, eguINR, iINR_b, oINR_b,
        random, randomINR];
    cw: (3, D), cb: (1, D) depthwise conv; g, beta: (3, D) LayerNorm affine.
    dot_dtype: dtype for matmul operands (bf16 recommended on v6e/v7x;
    accumulation / LayerNorm stay f32 either way).

    All pad entries are zero — this keeps pad lanes zero through the whole
    kernel, which the mask-free LayerNorm relies on.  Do not change.
    """
    D = int(w.shape[-1])
    Dp = _round_up(D, 128)
    pad = Dp - D
    f32 = jnp.float32

    wp = jnp.pad(w.astype(f32), ((0, 0), (0, pad), (0, pad)))
    bp = jnp.pad(b.astype(f32), ((0, 0), (0, pad)))

    params = dict(
        # Fused shared-input matmuls: 7 MXU pushes instead of 10.
        wA=jnp.concatenate([wp[0], wp[3], wp[4]], axis=1).astype(dot_dtype),  # (Dp, 3Dp)
        bA=jnp.concatenate([bp[0], bp[3], bp[4]], axis=0)[None],              # (1, 3Dp)
        wB=jnp.concatenate([wp[6], wp[8]], axis=1).astype(dot_dtype),         # (Dp, 2Dp)
        bB=jnp.concatenate([bp[6], bp[8]], axis=0)[None],                     # (1, 2Dp)
        wR=jnp.stack([wp[1], wp[2], wp[5], wp[7], wp[9]]).astype(dot_dtype),  # (5, Dp, Dp)
        bR=jnp.stack([bp[1], bp[2], bp[5], bp[7], bp[9]]),                    # (5, Dp)
        cw=jnp.pad(cw.astype(f32), ((0, 0), (0, pad))),                       # (3, Dp)
        cb=jnp.pad(cb.astype(f32), ((0, 0), (0, pad))),                       # (1, Dp)
        g=jnp.pad(g.astype(f32), ((0, 0), (0, pad))),                         # (3, Dp), pad gamma = 0
        beta=jnp.pad(beta.astype(f32), ((0, 0), (0, pad))),                   # (3, Dp), pad beta = 0
    )
    meta = dict(d_real=D, d_pad=Dp, dot_dtype=dot_dtype)
    return params, meta


def strinr_apply_padded(x_padded, params, meta, *, s_real=None):
    """Run the fused kernel on an already padded (B, Sp, Dp) input and return
    a (B, Sp, Dp) output (pad lanes stay zero).  When stacking layers, keep
    activations in this padded form and call this directly — avoids one full
    extra HBM pad/slice pass per layer."""
    B, Sp, Dp = x_padded.shape
    assert Dp == meta["d_pad"] and Sp % 8 == 0
    if s_real is None:
        s_real = Sp
    D = meta["d_real"]
    dot_dtype = meta["dot_dtype"]

    bt = _pick_batch_tile(B, Sp, Dp)
    grid = (B // bt,)

    kernel = functools.partial(_strinr_kernel, d_real=D, s_real=int(s_real),
                               dot_dtype=dot_dtype)

    # Advisory cost estimate, computed on the padded shapes the kernel really
    # executes (wrapper pad/slice traffic is not part of the kernel).
    rows = B * Sp
    w_bytes = int((params["wA"].size + params["wB"].size + params["wR"].size)
                  * params["wA"].dtype.itemsize)
    vec_bytes = 4 * int(params["bA"].size + params["bB"].size + params["bR"].size
                        + params["cw"].size + params["cb"].size
                        + params["g"].size + params["beta"].size)
    cost = pl.CostEstimate(
        flops=2 * rows * Dp * Dp * 10,             # 7 fused pushes = 10 DxD dots
        transcendentals=6 * rows * Dp,             # 5x sin + 1x sigmoid
        bytes_accessed=int(x_padded.dtype.itemsize) * 2 * rows * Dp + w_bytes + vec_bytes,
    )

    # VMEM: double-buffered x/out tiles + double-buffered resident params +
    # ~12 live (N, Dp) f32 intermediates, clamped to the real chip budget.
    act_tile = bt * Sp * Dp * 4
    vmem_req = 4 * act_tile + 2 * (w_bytes + vec_bytes) + 12 * act_tile
    vmem_limit = int(min(_vmem_budget_bytes(), max(32 << 20, vmem_req)))

    def const_spec(shape):
        return pl.BlockSpec(shape, lambda i: (0,) * len(shape))
    # TODO(synk): pipeline_mode=pl.Buffered(1) on the constant-index param
    # specs would free one duplicated weight buffer (~small VMEM win); left
    # off because single-buffered pipeline_mode support is not uniform.

    out = pl.pallas_call(
        kernel,
        out_shape=jax.ShapeDtypeStruct((B, Sp, Dp), x_padded.dtype),
        grid_spec=pltpu.PrefetchScalarGridSpec(
            num_scalar_prefetch=0,
            grid=grid,
            in_specs=[
                pl.BlockSpec((bt, Sp, Dp), lambda i: (i, 0, 0)),   # x
                const_spec((Dp, 3 * Dp)),                          # wA fused
                const_spec((1, 3 * Dp)),                           # bA fused
                const_spec((Dp, 2 * Dp)),                          # wB fused
                const_spec((1, 2 * Dp)),                           # bB fused
                const_spec((5, Dp, Dp)),                           # remaining W
                const_spec((5, Dp)),                               # remaining b
                const_spec((3, Dp)),                               # conv weight
                const_spec((1, Dp)),                               # conv bias
                const_spec((3, Dp)),                               # LN gamma
                const_spec((3, Dp)),                               # LN beta
            ],
            out_specs=pl.BlockSpec((bt, Sp, Dp), lambda i: (i, 0, 0)),
        ),
        compiler_params=pltpu.CompilerParams(
            dimension_semantics=("parallel",),
            vmem_limit_bytes=vmem_limit,
        ),
        cost_estimate=cost,
    )(x_padded, params["wA"], params["bA"], params["wB"], params["bB"],
      params["wR"], params["bR"], params["cw"], params["cb"],
      params["g"], params["beta"])
    return out


def strinr_layer(x, params, meta):
    """Convenience wrapper: pad -> fused kernel -> slice back to (B, S, D)."""
    B, S, D = x.shape
    assert D == meta["d_real"]
    Dp = meta["d_pad"]
    Sp = _round_up(S, 8)
    xp = jnp.pad(x, ((0, 0), (0, Sp - S), (0, Dp - D)))
    out = strinr_apply_padded(xp, params, meta, s_real=S)
    return out[:, :S, :D]


# -----------------------------------------------------------------------------
# Pure-JAX reference (mirrors the PyTorch forward, eval mode)
# -----------------------------------------------------------------------------
def strinr_reference(x, w, b, cw, cb, g, beta):
    def linear(h, i):
        return h @ w[i] + b[i]

    def inr(h, i, act):
        h = linear(h, i)
        return jnp.sin(h) if act else h

    def layernorm(h, i):
        mu = jnp.mean(h, axis=-1, keepdims=True)
        var = jnp.mean((h - mu) ** 2, axis=-1, keepdims=True)
        return (h - mu) * jax.lax.rsqrt(var + 1e-5) * g[i] + beta[i]

    x = x.astype(jnp.float32)
    x_res = layernorm(x, 0)
    x_out = inr(inr(x, 0, True), 1, False)
    xpad = jnp.pad(x, ((0, 0), (1, 1), (0, 0)))
    sak = xpad[:, :-2] * cw[0] + x * cw[1] + xpad[:, 2:] * cw[2] + cb[0]
    sak = inr(sak, 2, True)
    egu = linear(x, 3) * jax.nn.sigmoid(linear(x, 4))
    egu = inr(egu, 5, True)
    y = layernorm(x_res + x_out + sak + egu, 1)
    y_out = inr(inr(y, 6, True), 7, False)
    rnd = inr(linear(y, 8), 9, True)
    return layernorm(y + y_out + rnd, 2)


# -----------------------------------------------------------------------------
# Demo / correctness check
# -----------------------------------------------------------------------------
if __name__ == "__main__":
    B, S, D = 2, 8, 32           # batch, sequence, layer_size
    key = jax.random.PRNGKey(0)
    kx, kw, kb, kcw, kcb, kg, kbeta = jax.random.split(key, 7)

    x = jax.random.normal(kx, (B, S, D), dtype=jnp.float32)

    # 10 linear layers in application order:
    # [iINR_f, oINR_f, sAKINR, egu_W1, egu_W2, eguINR, iINR_b, oINR_b, random, randomINR]
    w = jax.random.normal(kw, (10, D, D), dtype=jnp.float32) / jnp.sqrt(D)
    b = jax.random.normal(kb, (10, D), dtype=jnp.float32) * 0.01
    # depthwise conv (kernel=3) weights/bias for SpatialAKConv
    cw = jax.random.normal(kcw, (3, D), dtype=jnp.float32) / jnp.sqrt(3.0)
    cb = jax.random.normal(kcb, (1, D), dtype=jnp.float32) * 0.01
    # LayerNorm affine params for norm1/norm2/norm3
    g = 1.0 + 0.01 * jax.random.normal(kg, (3, D), dtype=jnp.float32)
    beta = 0.01 * jax.random.normal(kbeta, (3, D), dtype=jnp.float32)

    ref = strinr_reference(x, w, b, cw, cb, g, beta)

    # f32 dot path: strict check against the reference.
    params32, meta32 = prepare_strinr_params(w, b, cw, cb, g, beta,
                                             dot_dtype=jnp.float32)
    out32 = jax.block_until_ready(strinr_layer(x, params32, meta32))
    assert out32.shape == (B, S, D)
    assert jnp.allclose(out32, ref, atol=1e-4, rtol=1e-4), "f32 path mismatch"

    # bf16 dot path (v6e/v7x production setting): same structure, looser
    # tolerance because the matmul operands are quantized to bf16.
    params16, meta16 = prepare_strinr_params(w, b, cw, cb, g, beta,
                                             dot_dtype=jnp.bfloat16)
    out16 = jax.block_until_ready(strinr_layer(x, params16, meta16))
    assert out16.shape == (B, S, D)
    assert jnp.allclose(out16, ref, atol=1e-1, rtol=1e-1), "bf16 path mismatch"

    print("KERNEL_OK")
</pallas_src>

<mosaic_0001>
module attributes {stable_mosaic.version = 11 : i64} {
  func.func @_strinr_kernel(%arg0: i32, %arg1: memref<1x8x128xf32, #tpu.memory_space<vmem>>, %arg2: memref<128x384xf32, #tpu.memory_space<vmem>>, %arg3: memref<1x384xf32, #tpu.memory_space<vmem>>, %arg4: memref<128x256xf32, #tpu.memory_space<vmem>>, %arg5: memref<1x256xf32, #tpu.memory_space<vmem>>, %arg6: memref<5x128x128xf32, #tpu.memory_space<vmem>>, %arg7: memref<5x128xf32, #tpu.memory_space<vmem>>, %arg8: memref<3x128xf32, #tpu.memory_space<vmem>>, %arg9: memref<1x128xf32, #tpu.memory_space<vmem>>, %arg10: memref<3x128xf32, #tpu.memory_space<vmem>>, %arg11: memref<3x128xf32, #tpu.memory_space<vmem>>, %arg12: memref<1x8x128xf32, #tpu.memory_space<vmem>>) attributes {dimension_semantics = [#tpu.dimension_semantics<parallel>], iteration_bounds = array<i64: 2>, scalar_prefetch = 0 : i64, scratch_operands = 0 : i64, tpu.core_type = #tpu.core_type<tc>, window_params = [{transform_indices = @transform_0, window_bounds = array<i64: 1, 8, 128>}, {pipeline_mode = #tpu.pipeline_mode<synchronous>, transform_indices = @transform_1, window_bounds = array<i64: 128, 384>}, {pipeline_mode = #tpu.pipeline_mode<synchronous>, transform_indices = @transform_2, window_bounds = array<i64: 1, 384>}, {pipeline_mode = #tpu.pipeline_mode<synchronous>, transform_indices = @transform_3, window_bounds = array<i64: 128, 256>}, {pipeline_mode = #tpu.pipeline_mode<synchronous>, transform_indices = @transform_4, window_bounds = array<i64: 1, 256>}, {pipeline_mode = #tpu.pipeline_mode<synchronous>, transform_indices = @transform_5, window_bounds = array<i64: 5, 128, 128>}, {pipeline_mode = #tpu.pipeline_mode<synchronous>, transform_indices = @transform_6, window_bounds = array<i64: 5, 128>}, {pipeline_mode = #tpu.pipeline_mode<synchronous>, transform_indices = @transform_7, window_bounds = array<i64: 3, 128>}, {pipeline_mode = #tpu.pipeline_mode<synchronous>, transform_indices = @transform_8, window_bounds = array<i64: 1, 128>}, {pipeline_mode = #tpu.pipeline_mode<synchronous>, transform_indices = @transform_9, window_bounds = array<i64: 3, 128>}, {pipeline_mode = #tpu.pipeline_mode<synchronous>, transform_indices = @transform_10, window_bounds = array<i64: 3, 128>}, {transform_indices = @transform_11, window_bounds = array<i64: 1, 8, 128>}]} {
    %c0 = arith.constant 0 : index
    %c0_0 = arith.constant 0 : index
    %c0_1 = arith.constant 0 : index
    %0 = vector.load %arg1[%c0, %c0_0, %c0_1] : memref<1x8x128xf32, #tpu.memory_space<vmem>>, vector<1x8x128xf32>
    %1 = vector.shape_cast %0 : vector<1x8x128xf32> to vector<8x128xf32>
    %c0_2 = arith.constant 0 : index
    %c0_3 = arith.constant 0 : index
    %2 = vector.load %arg2[%c0_2, %c0_3] : memref<128x384xf32, #tpu.memory_space<vmem>>, vector<128x384xf32>
    %cst = arith.constant dense<0.000000e+00> : vector<8x384xf32>
    %3 = tpu.matmul %1, %2, %cst {dimension_numbers = #tpu.dot_dimension_numbers<[1], [0], [0], [1], [0, 0, 1, 1], [], []>} : vector<8x128xf32>, vector<128x384xf32>, vector<8x384xf32> -> vector<8x384xf32>
    %c0_4 = arith.constant 0 : index
    %c0_5 = arith.constant 0 : index
    %4 = vector.load %arg3[%c0_4, %c0_5] : memref<1x384xf32, #tpu.memory_space<vmem>>, vector<1x384xf32>
    %5 = vector.broadcast %4 : vector<1x384xf32> to vector<8x384xf32>
    %6 = arith.addf %3, %5 : vector<8x384xf32>
    %7 = vector.extract_strided_slice %6 {offsets = [0, 0], sizes = [8, 128], strides = [1, 1]} : vector<8x384xf32> to vector<8x128xf32>
    %8 = vector.extract_strided_slice %6 {offsets = [0, 128], sizes = [8, 128], strides = [1, 1]} : vector<8x384xf32> to vector<8x128xf32>
    %9 = vector.extract_strided_slice %6 {offsets = [0, 256], sizes = [8, 128], strides = [1, 1]} : vector<8x384xf32> to vector<8x128xf32>
    %10 = arith.negf %9 : vector<8x128xf32>
    %11 = math.exp %10 : vector<8x128xf32>
    %cst_6 = arith.constant 1.000000e+00 : f32
    %12 = vector.broadcast %cst_6 : f32 to vector<8x128xf32>
    %13 = arith.addf %12, %11 : vector<8x128xf32>
    %14 = arith.divf %12, %13 : vector<8x128xf32>
    %15 = arith.mulf %8, %14 : vector<8x128xf32>
    %16 = math.sin %7 : vector<8x128xf32>
    %c0_7 = arith.constant 0 : index
    %c0_8 = arith.constant 0 : index
    %c0_9 = arith.constant 0 : index
    %17 = vector.load %arg6[%c0_7, %c0_8, %c0_9] : memref<5x128x128xf32, #tpu.memory_space<vmem>>, vector<1x128x128xf32>
    %18 = vector.shape_cast %17 : vector<1x128x128xf32> to vector<128x128xf32>
    %cst_10 = arith.constant dense<0.000000e+00> : vector<8x128xf32>
    %19 = tpu.matmul %16, %18, %cst_10 {dimension_numbers = #tpu.dot_dimension_numbers<[1], [0], [0], [1], [0, 0, 1, 1], [], []>} : vector<8x128xf32>, vector<128x128xf32>, vector<8x128xf32> -> vector<8x128xf32>
    %c0_11 = arith.constant 0 : index
    %c0_12 = arith.constant 0 : index
    %20 = vector.load %arg7[%c0_11, %c0_12] : memref<5x128xf32, #tpu.memory_space<vmem>>, vector<1x128xf32>
    %21 = vector.shape_cast %20 : vector<1x128xf32> to vector<128xf32>
    %22 = vector.shape_cast %21 : vector<128xf32> to vector<1x128xf32>
    %23 = vector.broadcast %22 : vector<1x128xf32> to vector<8x128xf32>
    %24 = arith.addf %19, %23 : vector<8x128xf32>
    %c2 = arith.constant 2 : index
    %c0_13 = arith.constant 0 : index
    %c0_14 = arith.constant 0 : index
    %25 = vector.load %arg6[%c2, %c0_13, %c0_14] : memref<5x128x128xf32, #tpu.memory_space<vmem>>, vector<1x128x128xf32>
    %26 = vector.shape_cast %25 : vector<1x128x128xf32> to vector<128x128xf32>
    %cst_15 = arith.constant dense<0.000000e+00> : vector<8x128xf32>
    %27 = tpu.matmul %15, %26, %cst_15 {dimension_numbers = #tpu.dot_dimension_numbers<[1], [0], [0], [1], [0, 0, 1, 1], [], []>} : vector<8x128xf32>, vector<128x128xf32>, vector<8x128xf32> -> vector<8x128xf32>
    %c2_16 = arith.constant 2 : index
    %c0_17 = arith.constant 0 : index
    %28 = vector.load %arg7[%c2_16, %c0_17] : memref<5x128xf32, #tpu.memory_space<vmem>>, vector<1x128xf32>
    %29 = vector.shape_cast %28 : vector<1x128xf32> to vector<128xf32>
    %30 = vector.shape_cast %29 : vector<128xf32> to vector<1x128xf32>
    %31 = vector.broadcast %30 : vector<1x128xf32> to vector<8x128xf32>
    %32 = arith.addf %27, %31 : vector<8x128xf32>
    %33 = math.sin %32 : vector<8x128xf32>
    %34 = tpu.iota {dimensions = array<i32: 0>} : vector<8x1xi32>
    %c8_i32 = arith.constant 8 : i32
    %c0_i32 = arith.constant 0 : i32
    %35 = arith.cmpi eq, %c8_i32, %c0_i32 : i32
    %c1_i32 = arith.constant 1 : i32
    %36 = arith.select %35, %c1_i32, %c8_i32 : i32
    %37 = vector.broadcast %36 : i32 to vector<8x1xi32>
    %38 = arith.remsi %34, %37 : vector<8x1xi32>
    %c0_i32_18 = arith.constant 0 : i32
    %39 = vector.broadcast %c0_i32_18 : i32 to vector<8x1xi32>
    %40 = arith.cmpi ne, %38, %39 : vector<8x1xi32>
    %c0_i32_19 = arith.constant 0 : i32
    %41 = vector.broadcast %c0_i32_19 : i32 to vector<8x1xi32>
    %42 = arith.cmpi slt, %38, %41 : vector<8x1xi32>
    %c0_i32_20 = arith.constant 0 : i32
    %43 = arith.cmpi slt, %36, %c0_i32_20 : i32
    %44 = vector.broadcast %43 : i1 to vector<8x1xi1>
    %45 = vector.broadcast %44 : vector<8x1xi1> to vector<8x1xi1>
    %46 = arith.xori %42, %45 : vector<8x1xi1>
    %47 = arith.andi %46, %40 : vector<8x1xi1>
    %48 = vector.broadcast %36 : i32 to vector<8x1xi32>
    %49 = arith.addi %38, %48 : vector<8x1xi32>
    %50 = arith.select %47, %49, %38 : vector<8x1xi1>, vector<8x1xi32>
    %c0_i32_21 = arith.constant 0 : i32
    %51 = vector.broadcast %c0_i32_21 : i32 to vector<8x1xi32>
    %52 = arith.cmpi ne, %50, %51 : vector<8x1xi32>
    %c1_i32_22 = arith.constant 1 : i32
    %53 = tpu.dynamic_rotate %1 by %c1_i32_22 dim 0 : vector<8x128xf32>, i32 -> vector<8x128xf32>
    %cst_23 = arith.constant 0.000000e+00 : f32
    %54 = vector.shape_cast %52 : vector<8x1xi1> to vector<8x1xi1>
    %55 = vector.broadcast %54 : vector<8x1xi1> to vector<8x128xi1>
    %56 = vector.broadcast %cst_23 : f32 to vector<8x128xf32>
    %57 = arith.select %55, %53, %56 : vector<8x128xi1>, vector<8x128xf32>
    %c7_i32 = arith.constant 7 : i32
    %58 = vector.broadcast %c7_i32 : i32 to vector<8x1xi32>
    %59 = arith.cmpi ne, %50, %58 : vector<8x1xi32>
    %c7_i32_24 = arith.constant 7 : i32
    %60 = tpu.dynamic_rotate %1 by %c7_i32_24 dim 0 : vector<8x128xf32>, i32 -> vector<8x128xf32>
    %cst_25 = arith.constant 0.000000e+00 : f32
    %61 = vector.shape_cast %59 : vector<8x1xi1> to vector<8x1xi1>
    %62 = vector.broadcast %61 : vector<8x1xi1> to vector<8x128xi1>
    %63 = vector.broadcast %cst_25 : f32 to vector<8x128xf32>
    %64 = arith.select %62, %60, %63 : vector<8x128xi1>, vector<8x128xf32>
    %c0_26 = arith.constant 0 : index
    %c0_27 = arith.constant 0 : index
    %65 = vector.load %arg8[%c0_26, %c0_27] : memref<3x128xf32, #tpu.memory_space<vmem>>, vector<1x128xf32>
    %66 = vector.shape_cast %65 : vector<1x128xf32> to vector<128xf32>
    %67 = vector.shape_cast %66 : vector<128xf32> to vector<1x128xf32>
    %68 = vector.broadcast %67 : vector<1x128xf32> to vector<8x128xf32>
    %69 = arith.mulf %57, %68 : vector<8x128xf32>
    %c1 = arith.constant 1 : index
    %c0_28 = arith.constant 0 : index
    %70 = vector.load %arg8[%c1, %c0_28] : memref<3x128xf32, #tpu.memory_space<vmem>>, vector<1x128xf32>
    %71 = vector.shape_cast %70 : vector<1x128xf32> to vector<128xf32>
    %72 = vector.shape_cast %71 : vector<128xf32> to vector<1x128xf32>
    %73 = vector.broadcast %72 : vector<1x128xf32> to vector<8x128xf32>
    %74 = arith.mulf %1, %73 : vector<8x128xf32>
    %75 = arith.addf %69, %74 : vector<8x128xf32>
    %c2_29 = arith.constant 2 : index
    %c0_30 = arith.constant 0 : index
    %76 = vector.load %arg8[%c2_29, %c0_30] : memref<3x128xf32, #tpu.memory_space<vmem>>, vector<1x128xf32>
    %77 = vector.shape_cast %76 : vector<1x128xf32> to vector<128xf32>
    %78 = vector.shape_cast %77 : vector<128xf32> to vector<1x128xf32>
    %79 = vector.broadcast %78 : vector<1x128xf32> to vector<8x128xf32>
    %80 = arith.mulf %64, %79 : vector<8x128xf32>
    %81 = arith.addf %75, %80 : vector<8x128xf32>
    %c0_31 = arith.constant 0 : index
    %c0_32 = arith.constant 0 : index
    %82 = vector.load %arg9[%c0_31, %c0_32] : memref<1x128xf32, #tpu.memory_space<vmem>>, vector<1x128xf32>
    %83 = vector.shape_cast %82 : vector<1x128xf32> to vector<128xf32>
    %84 = vector.shape_cast %83 : vector<128xf32> to vector<1x128xf32>
    %85 = vector.broadcast %84 : vector<1x128xf32> to vector<8x128xf32>
    %86 = arith.addf %81, %85 : vector<8x128xf32>
    %c1_33 = arith.constant 1 : index
    %c0_34 = arith.constant 0 : index
    %c0_35 = arith.constant 0 : index
    %87 = vector.load %arg6[%c1_33, %c0_34, %c0_35] : memref<5x128x128xf32, #tpu.memory_space<vmem>>, vector<1x128x128xf32>
    %88 = vector.shape_cast %87 : vector<1x128x128xf32> to vector<128x128xf32>
    %cst_36 = arith.constant dense<0.000000e+00> : vector<8x128xf32>
    %89 = tpu.matmul %86, %88, %cst_36 {dimension_numbers = #tpu.dot_dimension_numbers<[1], [0], [0], [1], [0, 0, 1, 1], [], []>} : vector<8x128xf32>, vector<128x128xf32>, vector<8x128xf32> -> vector<8x128xf32>
    %c1_37 = arith.constant 1 : index
    %c0_38 = arith.constant 0 : index
    %90 = vector.load %arg7[%c1_37, %c0_38] : memref<5x128xf32, #tpu.memory_space<vmem>>, vector<1x128xf32>
    %91 = vector.shape_cast %90 : vector<1x128xf32> to vector<128xf32>
    %92 = vector.shape_cast %91 : vector<128xf32> to vector<1x128xf32>
    %93 = vector.broadcast %92 : vector<1x128xf32> to vector<8x128xf32>
    %94 = arith.addf %89, %93 : vector<8x128xf32>
    %95 = math.sin %94 : vector<8x128xf32>
    %cst_39 = arith.constant dense<0.000000e+00> : vector<8xf32>
    %96 = vector.multi_reduction <add>, %1, %cst_39 [1] : vector<8x128xf32> to vector<8xf32>
    %97 = vector.shape_cast %96 : vector<8xf32> to vector<8x1xf32>
    %cst_40 = arith.constant 3.125000e-02 : f32
    %98 = vector.broadcast %cst_40 : f32 to vector<8x1xf32>
    %99 = arith.mulf %97, %98 : vector<8x1xf32>
    %100 = arith.mulf %1, %1 : vector<8x128xf32>
    %cst_41 = arith.constant dense<0.000000e+00> : vector<8xf32>
    %101 = vector.multi_reduction <add>, %100, %cst_41 [1] : vector<8x128xf32> to vector<8xf32>
    %102 = vector.shape_cast %101 : vector<8xf32> to vector<8x1xf32>
    %cst_42 = arith.constant 3.125000e-02 : f32
    %103 = vector.broadcast %cst_42 : f32 to vector<8x1xf32>
    %104 = arith.mulf %102, %103 : vector<8x1xf32>
    %105 = arith.mulf %99, %99 : vector<8x1xf32>
    %106 = arith.subf %104, %105 : vector<8x1xf32>
    %107 = vector.broadcast %99 : vector<8x1xf32> to vector<8x128xf32>
    %108 = arith.subf %1, %107 : vector<8x128xf32>
    %cst_43 = arith.constant 9.99999974E-6 : f32
    %109 = vector.broadcast %cst_43 : f32 to vector<8x1xf32>
    %110 = arith.addf %106, %109 : vector<8x1xf32>
    %111 = math.rsqrt %110 : vector<8x1xf32>
    %112 = vector.broadcast %111 : vector<8x1xf32> to vector<8x128xf32>
    %113 = arith.mulf %108, %112 : vector<8x128xf32>
    %c0_44 = arith.constant 0 : index
    %c0_45 = arith.constant 0 : index
    %114 = vector.load %arg10[%c0_44, %c0_45] : memref<3x128xf32, #tpu.memory_space<vmem>>, vector<1x128xf32>
    %115 = vector.shape_cast %114 : vector<1x128xf32> to vector<128xf32>
    %116 = vector.shape_cast %115 : vector<128xf32> to vector<1x128xf32>
    %117 = vector.broadcast %116 : vector<1x128xf32> to vector<8x128xf32>
    %118 = arith.mulf %113, %117 : vector<8x128xf32>
    %c0_46 = arith.constant 0 : index
    %c0_47 = arith.constant 0 : index
    %119 = vector.load %arg11[%c0_46, %c0_47] : memref<3x128xf32, #tpu.memory_space<vmem>>, vector<1x128xf32>
    %120 = vector.shape_cast %119 : vector<1x128xf32> to vector<128xf32>
    %121 = vector.shape_cast %120 : vector<128xf32> to vector<1x128xf32>
    %122 = vector.broadcast %121 : vector<1x128xf32> to vector<8x128xf32>
    %123 = arith.addf %118, %122 : vector<8x128xf32>
    %124 = arith.addf %123, %24 : vector<8x128xf32>
    %125 = arith.addf %124, %95 : vector<8x128xf32>
    %126 = arith.addf %125, %33 : vector<8x128xf32>
    %cst_48 = arith.constant dense<0.000000e+00> : vector<8xf32>
    %127 = vector.multi_reduction <add>, %126, %cst_48 [1] : vector<8x128xf32> to vector<8xf32>
    %128 = vector.shape_cast %127 : vector<8xf32> to vector<8x1xf32>
    %cst_49 = arith.constant 3.125000e-02 : f32
    %129 = vector.broadcast %cst_49 : f32 to vector<8x1xf32>
    %130 = arith.mulf %128, %129 : vector<8x1xf32>
    %131 = arith.mulf %126, %126 : vector<8x128xf32>
    %cst_50 = arith.constant dense<0.000000e+00> : vector<8xf32>
    %132 = vector.multi_reduction <add>, %131, %cst_50 [1] : vector<8x128xf32> to vector<8xf32>
    %133 = vector.shape_cast %132 : vector<8xf32> to vector<8x1xf32>
    %cst_51 = arith.constant 3.125000e-02 : f32
    %134 = vector.broadcast %cst_51 : f32 to vector<8x1xf32>
    %135 = arith.mulf %133, %134 : vector<8x1xf32>
    %136 = arith.mulf %130, %130 : vector<8x1xf32>
    %137 = arith.subf %135, %136 : vector<8x1xf32>
    %138 = vector.broadcast %130 : vector<8x1xf32> to vector<8x128xf32>
    %139 = arith.subf %126, %138 : vector<8x128xf32>
    %cst_52 = arith.constant 9.99999974E-6 : f32
    %140 = vector.broadcast %cst_52 : f32 to vector<8x1xf32>
    %141 = arith.addf %137, %140 : vector<8x1xf32>
    %142 = math.rsqrt %141 : vector<8x1xf32>
    %143 = vector.broadcast %142 : vector<8x1xf32> to vector<8x128xf32>
    %144 = arith.mulf %139, %143 : vector<8x128xf32>
    %c1_53 = arith.constant 1 : index
    %c0_54 = arith.constant 0 : index
    %145 = vector.load %arg10[%c1_53, %c0_54] : memref<3x128xf32, #tpu.memory_space<vmem>>, vector<1x128xf32>
    %146 = vector.shape_cast %145 : vector<1x128xf32> to vector<128xf32>
    %147 = vector.shape_cast %146 : vector<128xf32> to vector<1x128xf32>
    %148 = vector.broadcast %147 : vector<1x128xf32> to vector<8x128xf32>
    %149 = arith.mulf %144, %148 : vector<8x128xf32>
    %c1_55 = arith.constant 1 : index
    %c0_56 = arith.constant 0 : index
    %150 = vector.load %arg11[%c1_55, %c0_56] : memref<3x128xf32, #tpu.memory_space<vmem>>, vector<1x128xf32>
    %151 = vector.shape_cast %150 : vector<1x128xf32> to vector<128xf32>
    %152 = vector.shape_cast %151 : vector<128xf32> to vector<1x128xf32>
    %153 = vector.broadcast %152 : vector<1x128xf32> to vector<8x128xf32>
    %154 = arith.addf %149, %153 : vector<8x128xf32>
    %c0_57 = arith.constant 0 : index
    %c0_58 = arith.constant 0 : index
    %155 = vector.load %arg4[%c0_57, %c0_58] : memref<128x256xf32, #tpu.memory_space<vmem>>, vector<128x256xf32>
    %cst_59 = arith.constant dense<0.000000e+00> : vector<8x256xf32>
    %156 = tpu.matmul %154, %155, %cst_59 {dimension_numbers = #tpu.dot_dimension_numbers<[1], [0], [0], [1], [0, 0, 1, 1], [], []>} : vector<8x128xf32>, vector<128x256xf32>, vector<8x256xf32> -> vector<8x256xf32>
    %c0_60 = arith.constant 0 : index
    %c0_61 = arith.constant 0 : index
    %157 = vector.load %arg5[%c0_60, %c0_61] : memref<1x256xf32, #tpu.memory_space<vmem>>, vector<1x256xf32>
    %158 = vector.broadcast %157 : vector<1x256xf32> to vector<8x256xf32>
    %159 = arith.addf %156, %158 : vector<8x256xf32>
    %160 = vector.extract_strided_slice %159 {offsets = [0, 0], sizes = [8, 128], strides = [1, 1]} : vector<8x256xf32> to vector<8x128xf32>
    %161 = math.sin %160 : vector<8x128xf32>
    %c3 = arith.constant 3 : index
    %c0_62 = arith.constant 0 : index
    %c0_63 = arith.constant 0 : index
    %162 = vector.load %arg6[%c3, %c0_62, %c0_63] : memref<5x128x128xf32, #tpu.memory_space<vmem>>, vector<1x128x128xf32>
    %163 = vector.shape_cast %162 : vector<1x128x128xf32> to vector<128x128xf32>
    %cst_64 = arith.constant dense<0.000000e+00> : vector<8x128xf32>
    %164 = tpu.matmul %161, %163, %cst_64 {dimension_numbers = #tpu.dot_dimension_numbers<[1], [0], [0], [1], [0, 0, 1, 1], [], []>} : vector<8x128xf32>, vector<128x128xf32>, vector<8x128xf32> -> vector<8x128xf32>
    %c3_65 = arith.constant 3 : index
    %c0_66 = arith.constant 0 : index
    %165 = vector.load %arg7[%c3_65, %c0_66] : memref<5x128xf32, #tpu.memory_space<vmem>>, vector<1x128xf32>
    %166 = vector.shape_cast %165 : vector<1x128xf32> to vector<128xf32>
    %167 = vector.shape_cast %166 : vector<128xf32> to vector<1x128xf32>
    %168 = vector.broadcast %167 : vector<1x128xf32> to vector<8x128xf32>
    %169 = arith.addf %164, %168 : vector<8x128xf32>
    %170 = vector.extract_strided_slice %159 {offsets = [0, 128], sizes = [8, 128], strides = [1, 1]} : vector<8x256xf32> to vector<8x128xf32>
    %c4 = arith.constant 4 : index
    %c0_67 = arith.constant 0 : index
    %c0_68 = arith.constant 0 : index
    %171 = vector.load %arg6[%c4, %c0_67, %c0_68] : memref<5x128x128xf32, #tpu.memory_space<vmem>>, vector<1x128x128xf32>
    %172 = vector.shape_cast %171 : vector<1x128x128xf32> to vector<128x128xf32>
    %cst_69 = arith.constant dense<0.000000e+00> : vector<8x128xf32>
    %173 = tpu.matmul %170, %172, %cst_69 {dimension_numbers = #tpu.dot_dimension_numbers<[1], [0], [0], [1], [0, 0, 1, 1], [], []>} : vector<8x128xf32>, vector<128x128xf32>, vector<8x128xf32> -> vector<8x128xf32>
    %c4_70 = arith.constant 4 : index
    %c0_71 = arith.constant 0 : index
    %174 = vector.load %arg7[%c4_70, %c0_71] : memref<5x128xf32, #tpu.memory_space<vmem>>, vector<1x128xf32>
    %175 = vector.shape_cast %174 : vector<1x128xf32> to vector<128xf32>
    %176 = vector.shape_cast %175 : vector<128xf32> to vector<1x128xf32>
    %177 = vector.broadcast %176 : vector<1x128xf32> to vector<8x128xf32>
    %178 = arith.addf %173, %177 : vector<8x128xf32>
    %179 = math.sin %178 : vector<8x128xf32>
    %180 = arith.addf %154, %169 : vector<8x128xf32>
    %181 = arith.addf %180, %179 : vector<8x128xf32>
    %cst_72 = arith.constant dense<0.000000e+00> : vector<8xf32>
    %182 = vector.multi_reduction <add>, %181, %cst_72 [1] : vector<8x128xf32> to vector<8xf32>
    %183 = vector.shape_cast %182 : vector<8xf32> to vector<8x1xf32>
    %cst_73 = arith.constant 3.125000e-02 : f32
    %184 = vector.broadcast %cst_73 : f32 to vector<8x1xf32>
    %185 = arith.mulf %183, %184 : vector<8x1xf32>
    %186 = arith.mulf %181, %181 : vector<8x128xf32>
    %cst_74 = arith.constant dense<0.000000e+00> : vector<8xf32>
    %187 = vector.multi_reduction <add>, %186, %cst_74 [1] : vector<8x128xf32> to vector<8xf32>
    %188 = vector.shape_cast %187 : vector<8xf32> to vector<8x1xf32>
    %cst_75 = arith.constant 3.125000e-02 : f32
    %189 = vector.broadcast %cst_75 : f32 to vector<8x1xf32>
    %190 = arith.mulf %188, %189 : vector<8x1xf32>
    %191 = arith.mulf %185, %185 : vector<8x1xf32>
    %192 = arith.subf %190, %191 : vector<8x1xf32>
    %193 = vector.broadcast %185 : vector<8x1xf32> to vector<8x128xf32>
    %194 = arith.subf %181, %193 : vector<8x128xf32>
    %cst_76 = arith.constant 9.99999974E-6 : f32
    %195 = vector.broadcast %cst_76 : f32 to vector<8x1xf32>
    %196 = arith.addf %192, %195 : vector<8x1xf32>
    %197 = math.rsqrt %196 : vector<8x1xf32>
    %198 = vector.broadcast %197 : vector<8x1xf32> to vector<8x128xf32>
    %199 = arith.mulf %194, %198 : vector<8x128xf32>
    %c2_77 = arith.constant 2 : index
    %c0_78 = arith.constant 0 : index
    %200 = vector.load %arg10[%c2_77, %c0_78] : memref<3x128xf32, #tpu.memory_space<vmem>>, vector<1x128xf32>
    %201 = vector.shape_cast %200 : vector<1x128xf32> to vector<128xf32>
    %202 = vector.shape_cast %201 : vector<128xf32> to vector<1x128xf32>
    %203 = vector.broadcast %202 : vector<1x128xf32> to vector<8x128xf32>
    %204 = arith.mulf %199, %203 : vector<8x128xf32>
    %c2_79 = arith.constant 2 : index
    %c0_80 = arith.constant 0 : index
    %205 = vector.load %arg11[%c2_79, %c0_80] : memref<3x128xf32, #tpu.memory_space<vmem>>, vector<1x128xf32>
    %206 = vector.shape_cast %205 : vector<1x128xf32> to vector<128xf32>
    %207 = vector.shape_cast %206 : vector<128xf32> to vector<1x128xf32>
    %208 = vector.broadcast %207 : vector<1x128xf32> to vector<8x128xf32>
    %209 = arith.addf %204, %208 : vector<8x128xf32>
    %210 = vector.shape_cast %209 : vector<8x128xf32> to vector<1x8x128xf32>
    %c0_81 = arith.constant 0 : index
    %c0_82 = arith.constant 0 : index
    %c0_83 = arith.constant 0 : index
    %211 = vector.load %arg12[%c0_81, %c0_82, %c0_83] : memref<1x8x128xf32, #tpu.memory_space<vmem>>, vector<1x8x128xf32>
    tpu.vector_store %arg12[%c0_81, %c0_82, %c0_83], %210 {strides = array<i32>} : memref<1x8x128xf32, #tpu.memory_space<vmem>>, vector<1x8x128xf32>,
    return
  }
  func.func @transform_0(%arg0: i32) -> (i32, i32, i32) {
    %c0_i32 = arith.constant 0 : i32
    %c0_i32_0 = arith.constant 0 : i32
    %c0_i32_1 = arith.constant 0 : i32
    return %arg0, %c0_i32, %c0_i32_0 : i32, i32, i32
  }
  func.func @transform_1(%arg0: i32) -> (i32, i32) {
    %c0_i32 = arith.constant 0 : i32
    %c0_i32_0 = arith.constant 0 : i32
    %c0_i32_1 = arith.constant 0 : i32
    return %c0_i32, %c0_i32_0 : i32, i32
  }
  func.func @transform_2(%arg0: i32) -> (i32, i32) {
    %c0_i32 = arith.constant 0 : i32
    %c0_i32_0 = arith.constant 0 : i32
    %c0_i32_1 = arith.constant 0 : i32
    return %c0_i32, %c0_i32_0 : i32, i32
  }
  func.func @transform_3(%arg0: i32) -> (i32, i32) {
    %c0_i32 = arith.constant 0 : i32
    %c0_i32_0 = arith.constant 0 : i32
    %c0_i32_1 = arith.constant 0 : i32
    return %c0_i32, %c0_i32_0 : i32, i32
  }
  func.func @transform_4(%arg0: i32) -> (i32, i32) {
    %c0_i32 = arith.constant 0 : i32
    %c0_i32_0 = arith.constant 0 : i32
    %c0_i32_1 = arith.constant 0 : i32
    return %c0_i32, %c0_i32_0 : i32, i32
  }
  func.func @transform_5(%arg0: i32) -> (i32, i32, i32) {
    %c0_i32 = arith.constant 0 : i32
    %c0_i32_0 = arith.constant 0 : i32
    %c0_i32_1 = arith.constant 0 : i32
    %c0_i32_2 = arith.constant 0 : i32
    return %c0_i32, %c0_i32_0, %c0_i32_1 : i32, i32, i32
  }
  func.func @transform_6(%arg0: i32) -> (i32, i32) {
    %c0_i32 = arith.constant 0 : i32
    %c0_i32_0 = arith.constant 0 : i32
    %c0_i32_1 = arith.constant 0 : i32
    return %c0_i32, %c0_i32_0 : i32, i32
  }
  func.func @transform_7(%arg0: i32) -> (i32, i32) {
    %c0_i32 = arith.constant 0 : i32
    %c0_i32_0 = arith.constant 0 : i32
    %c0_i32_1 = arith.constant 0 : i32
    return %c0_i32, %c0_i32_0 : i32, i32
  }
  func.func @transform_8(%arg0: i32) -> (i32, i32) {
    %c0_i32 = arith.constant 0 : i32
    %c0_i32_0 = arith.constant 0 : i32
    %c0_i32_1 = arith.constant 0 : i32
    return %c0_i32, %c0_i32_0 : i32, i32
  }
  func.func @transform_9(%arg0: i32) -> (i32, i32) {
    %c0_i32 = arith.constant 0 : i32
    %c0_i32_0 = arith.constant 0 : i32
    %c0_i32_1 = arith.constant 0 : i32
    return %c0_i32, %c0_i32_0 : i32, i32
  }
  func.func @transform_10(%arg0: i32) -> (i32, i32) {
    %c0_i32 = arith.constant 0 : i32
    %c0_i32_0 = arith.constant 0 : i32
    %c0_i32_1 = arith.constant 0 : i32
    return %c0_i32, %c0_i32_0 : i32, i32
  }
  func.func @transform_11(%arg0: i32) -> (i32, i32, i32) {
    %c0_i32 = arith.constant 0 : i32
    %c0_i32_0 = arith.constant 0 : i32
    %c0_i32_1 = arith.constant 0 : i32
    return %arg0, %c0_i32, %c0_i32_0 : i32, i32, i32
  }
}

</mosaic_0001>

<llo_original>
// kernel: tpu_custom_call.1
$region0: #{tpu_custom_call.1}
  #allocation0 [shape = 'u32[]', space=smem, size = 0x4, offset = 0x4, fixed_abs, tag = 'smem constant byte address 0x4 - core index']
  #allocation1 [shape = 'u32[144,128]{1,0:T(1,128)}', space=vmem, size = 0x12000, scoped, tag = 'internal scratch']
  %s0 = inlined_call_operand.hbm [shape: f32[2,8,128], index: 0, kind: input, shape index: {}]
  %s1 = inlined_call_operand.hbm [shape: f32[128,384], index: 1, kind: input, shape index: {}]
  %s2 = inlined_call_operand.hbm [shape: f32[1,384], index: 2, kind: input, shape index: {}]
  %s3 = inlined_call_operand.hbm [shape: f32[128,256], index: 3, kind: input, shape index: {}]
  %s4 = inlined_call_operand.vmem [shape: f32[1,256], index: 4, kind: input, shape index: {}]
  %s5 = inlined_call_operand.hbm [shape: f32[5,128,128], index: 5, kind: input, shape index: {}]
  %s6 = inlined_call_operand.vmem [shape: f32[5,128], index: 6, kind: input, shape index: {}]
  %s7 = inlined_call_operand.vmem [shape: f32[3,128], index: 7, kind: input, shape index: {}]
  %s8 = inlined_call_operand.vmem [shape: f32[1,128], index: 8, kind: input, shape index: {}]
  %s9 = inlined_call_operand.vmem [shape: f32[3,128], index: 9, kind: input, shape index: {}]
  %s10 = inlined_call_operand.vmem [shape: f32[3,128], index: 10, kind: input, shape index: {}]
  %s11 = inlined_call_operand.hbm [shape: f32[2,8,128], index: 11, kind: output, shape index: {}]
  %s12 = sld [smem:[#allocation0]]
  $region97: #{tpu_custom_call.1} parent=0
    _
  %s14 = ssub.s32 1, %s12
  %s15 = scalar_select 0, %s14, %s12
  $region1: #{tpu_custom_call.1} parent=0
    #allocation2 [shape = 'u8[8192]{0}', space=vmem, size = 0x2000, scoped, tag = 'input window, operand 0']
    #allocation3 [shape = 's32[2]{0}', space=sflag, size = 0x8, scoped, tag = 'scoped memory for tpu_custom_call.1']
    #allocation4 [shape = 's32[2]{0}', space=sflag, size = 0x8, scoped, tag = 'scoped memory for tpu_custom_call.1']
    #allocation5 [shape = 'u8[196608]{0}', space=vmem, size = 0x30000, scoped, tag = 'input window, operand 1, single buffered']
    #allocation6 [shape = 's32[1]{0}', space=sflag, size = 0x4, scoped, tag = 'scoped memory for tpu_custom_call.1']
    #allocation7 [shape = 'u8[1536]{0}', space=vmem, size = 0x800, scoped, tag = 'input window, operand 2, single buffered']
    #allocation8 [shape = 'u8[131072]{0}', space=vmem, size = 0x20000, scoped, tag = 'input window, operand 3, single buffered']
    #allocation9 [shape = 's32[1]{0}', space=sflag, size = 0x4, scoped, tag = 'scoped memory for tpu_custom_call.1']
    #allocation10 [shape = 'u8[327680]{0}', space=vmem, size = 0x50000, scoped, tag = 'input window, operand 5, single buffered']
    #allocation11 [shape = 'u8[8192]{0}', space=vmem, size = 0x2000, scoped, tag = 'output window, operand 0']
    %16 = vsyncpa [#allocation3], 0
    %s17 = scalar_lea.sflag [#allocation3], 1
    %18 = vsyncpa %s17, 0
    %19 = vsyncpa [#allocation6], 0
    %20 = vsyncpa [#allocation9], 0
    %21 = vsyncpa [#allocation4], 0
    %s22 = scalar_lea.sflag [#allocation4], 1
    %23 = vsyncpa %s22, 0
    loop: start=0, step=1, limit=4
    $region2: #{tpu_custom_call.1} parent=1 // loop_pre_header
      _
    $region3: #{tpu_custom_call.1} parent=1 // loop_header
      %s25 = sphi 0, %s29
      %p26 = scmp.ge.s32.totalorder %s25, 4
      %s35 = sphi 0, %s37
      %s38 = sphi 0, %s35
      %s39 = sphi 0, %s38
      %s55 = sphi 0, %s39
      %s59 = sphi 0, %s59
      %s61 = sphi 0, %s59
      %s62 = sphi 0, %s61
      %s76 = sphi 0, %s62
      %s80 = sphi 0, %s80
      %s82 = sphi 0, %s80
      %s83 = sphi 0, %s82
      %s97 = sphi 0, %s83
      %s101 = sphi 0, %s101
      %s103 = sphi 0, %s101
      %s104 = sphi 0, %s103
      %s118 = sphi 0, %s104
      %s122 = sphi 0, %s122
      %s124 = sphi 0, %s122
      %s125 = sphi 0, %s124
      %s139 = sphi 0, %s125
      %s143 = sphi 0, %s143
      %s145 = sphi 0, %s143
      %s146 = sphi 0, %s145
      %s160 = sphi 0, %s146
      %s164 = sphi 0, %s164
      %s166 = sphi 0, %s164
      %s167 = sphi 0, %s166
      %s181 = sphi 0, %s167
      %s185 = sphi 0, %s185
      %s187 = sphi 0, %s185
      %s188 = sphi 0, %s187
      %s202 = sphi 0, %s188
      %s206 = sphi 0, %s206
      %s208 = sphi 0, %s206
      %s209 = sphi 0, %s208
      %s223 = sphi 0, %s209
      %s227 = sphi 0, %s227
      %s229 = sphi 0, %s227
      %s230 = sphi 0, %s229
      %s244 = sphi 0, %s230
      %s248 = sphi 0, %s248
      %s250 = sphi 0, %s248
      %s251 = sphi 0, %s250
      %s265 = sphi 0, %s251
      %s271 = sphi 0, %s273
      %s274 = sphi 0, %s271
      %s275 = sphi 0, %s274
      %s291 = sphi 0, %s275
    $region4: #{tpu_custom_call.1} parent=1 // loop_header_branch
      %28 = sbr.rel (%p26) target = $region8
    $region5: #{tpu_custom_call.1} parent=1 // loop_body
      %s30 = ssub.s32 %s25, 1
      %s31 = ssub.s32 %s25, 2
      %s32 = sadd.s32 %s25, 1
      %s33 = ssub.s32 %s25, %s32
      %p34 = scmp.eq.s32.totalorder %s33, 0
      %s36 = sadd.s32 %s35, 1
      %s37 = scalar_select %p34, %s35, %s36
      %p40 = pneg %p34
      %p41 = scmp.eq.s32.totalorder %s25, 1
      %p42 = por %p40, %p41
      %p43 = scmp.ne.s32.totalorder %s35, %s38
      %p44 = scmp.eq.s32.totalorder %s25, 0
      %p45 = por %p43, %p44
      %p46 = scmp.ne.s32.totalorder %s35, %s38
      %p47 = scmp.eq.s32.totalorder %s30, 1
      %p48 = por %p46, %p47
      %p49 = scmp.ne.s32.totalorder %s38, %s39
      %p50 = scmp.eq.s32.totalorder %s30, 0
      %p51 = por %p49, %p50
      %p52 = scmp.ne.s32.totalorder %s38, %s39
      %p53 = scmp.eq.s32.totalorder %s31, 1
      %p54 = por %p52, %p53
      %p56 = scmp.ne.s32.totalorder %s39, %s55
      %p57 = scmp.eq.s32.totalorder %s31, 0
      %p58 = por %p56, %p57
      %s60 = sadd.s32 %s59, 1
      %p63 = scmp.eq.s32.totalorder %s25, 1
      %p64 = scmp.ne.s32.totalorder %s59, %s61
      %p65 = scmp.eq.s32.totalorder %s25, 0
      %p66 = por %p64, %p65
      %p67 = scmp.ne.s32.totalorder %s59, %s61
      %p68 = scmp.eq.s32.totalorder %s30, 1
      %p69 = por %p67, %p68
      %p70 = scmp.ne.s32.totalorder %s61, %s62
      %p71 = scmp.eq.s32.totalorder %s30, 0
      %p72 = por %p70, %p71
      %p73 = scmp.ne.s32.totalorder %s61, %s62
      %p74 = scmp.eq.s32.totalorder %s31, 1
      %p75 = por %p73, %p74
      %p77 = scmp.ne.s32.totalorder %s62, %s76
      %p78 = scmp.eq.s32.totalorder %s31, 0
      %p79 = por %p77, %p78
      %s81 = sadd.s32 %s80, 1
      %p84 = scmp.eq.s32.totalorder %s25, 1
      %p85 = scmp.ne.s32.totalorder %s80, %s82
      %p86 = scmp.eq.s32.totalorder %s25, 0
      %p87 = por %p85, %p86
      %p88 = scmp.ne.s32.totalorder %s80, %s82
      %p89 = scmp.eq.s32.totalorder %s30, 1
      %p90 = por %p88, %p89
      %p91 = scmp.ne.s32.totalorder %s82, %s83
      %p92 = scmp.eq.s32.totalorder %s30, 0
      %p93 = por %p91, %p92
      %p94 = scmp.ne.s32.totalorder %s82, %s83
      %p95 = scmp.eq.s32.totalorder %s31, 1
      %p96 = por %p94, %p95
      %p98 = scmp.ne.s32.totalorder %s83, %s97
      %p99 = scmp.eq.s32.totalorder %s31, 0
      %p100 = por %p98, %p99
      %s102 = sadd.s32 %s101, 1
      %p105 = scmp.eq.s32.totalorder %s25, 1
      %p106 = scmp.ne.s32.totalorder %s101, %s103
      %p107 = scmp.eq.s32.totalorder %s25, 0
      %p108 = por %p106, %p107
      %p109 = scmp.ne.s32.totalorder %s101, %s103
      %p110 = scmp.eq.s32.totalorder %s30, 1
      %p111 = por %p109, %p110
      %p112 = scmp.ne.s32.totalorder %s103, %s104
      %p113 = scmp.eq.s32.totalorder %s30, 0
      %p114 = por %p112, %p113
      %p115 = scmp.ne.s32.totalorder %s103, %s104
      %p116 = scmp.eq.s32.totalorder %s31, 1
      %p117 = por %p115, %p116
      %p119 = scmp.ne.s32.totalorder %s104, %s118
      %p120 = scmp.eq.s32.totalorder %s31, 0
      %p121 = por %p119, %p120
      %s123 = sadd.s32 %s122, 1
      %p126 = scmp.eq.s32.totalorder %s25, 1
      %p127 = scmp.ne.s32.totalorder %s122, %s124
      %p128 = scmp.eq.s32.totalorder %s25, 0
      %p129 = por %p127, %p128
      %p130 = scmp.ne.s32.totalorder %s122, %s124
      %p131 = scmp.eq.s32.totalorder %s30, 1
      %p132 = por %p130, %p131
      %p133 = scmp.ne.s32.totalorder %s124, %s125
      %p134 = scmp.eq.s32.totalorder %s30, 0
      %p135 = por %p133, %p134
      %p136 = scmp.ne.s32.totalorder %s124, %s125
      %p137 = scmp.eq.s32.totalorder %s31, 1
      %p138 = por %p136, %p137
      %p140 = scmp.ne.s32.totalorder %s125, %s139
      %p141 = scmp.eq.s32.totalorder %s31, 0
      %p142 = por %p140, %p141
      %s144 = sadd.s32 %s143, 1
      %p147 = scmp.eq.s32.totalorder %s25, 1
      %p148 = scmp.ne.s32.totalorder %s143, %s145
      %p149 = scmp.eq.s32.totalorder %s25, 0
      %p150 = por %p148, %p149
      %p151 = scmp.ne.s32.totalorder %s143, %s145
      %p152 = scmp.eq.s32.totalorder %s30, 1
      %p153 = por %p151, %p152
      %p154 = scmp.ne.s32.totalorder %s145, %s146
      %p155 = scmp.eq.s32.totalorder %s30, 0
      %p156 = por %p154, %p155
      %p157 = scmp.ne.s32.totalorder %s145, %s146
      %p158 = scmp.eq.s32.totalorder %s31, 1
      %p159 = por %p157, %p158
      %p161 = scmp.ne.s32.totalorder %s146, %s160
      %p162 = scmp.eq.s32.totalorder %s31, 0
      %p163 = por %p161, %p162
      %s165 = sadd.s32 %s164, 1
      %p168 = scmp.eq.s32.totalorder %s25, 1
      %p169 = scmp.ne.s32.totalorder %s164, %s166
      %p170 = scmp.eq.s32.totalorder %s25, 0
      %p171 = por %p169, %p170
      %p172 = scmp.ne.s32.totalorder %s164, %s166
      %p173 = scmp.eq.s32.totalorder %s30, 1
      %p174 = por %p172, %p173
      %p175 = scmp.ne.s32.totalorder %s166, %s167
      %p176 = scmp.eq.s32.totalorder %s30, 0
      %p177 = por %p175, %p176
      %p178 = scmp.ne.s32.totalorder %s166, %s167
      %p179 = scmp.eq.s32.totalorder %s31, 1
      %p180 = por %p178, %p179
      %p182 = scmp.ne.s32.totalorder %s167, %s181
      %p183 = scmp.eq.s32.totalorder %s31, 0
      %p184 = por %p182, %p183
      %s186 = sadd.s32 %s185, 1
      %p189 = scmp.eq.s32.totalorder %s25, 1
      %p190 = scmp.ne.s32.totalorder %s185, %s187
      %p191 = scmp.eq.s32.totalorder %s25, 0
      %p192 = por %p190, %p191
      %p193 = scmp.ne.s32.totalorder %s185, %s187
      %p194 = scmp.eq.s32.totalorder %s30, 1
      %p195 = por %p193, %p194
      %p196 = scmp.ne.s32.totalorder %s187, %s188
      %p197 = scmp.eq.s32.totalorder %s30, 0
      %p198 = por %p196, %p197
      %p199 = scmp.ne.s32.totalorder %s187, %s188
      %p200 = scmp.eq.s32.totalorder %s31, 1
      %p201 = por %p199, %p200
      %p203 = scmp.ne.s32.totalorder %s188, %s202
      %p204 = scmp.eq.s32.totalorder %s31, 0
      %p205 = por %p203, %p204
      %s207 = sadd.s32 %s206, 1
      %p210 = scmp.eq.s32.totalorder %s25, 1
      %p211 = scmp.ne.s32.totalorder %s206, %s208
      %p212 = scmp.eq.s32.totalorder %s25, 0
      %p213 = por %p211, %p212
      %p214 = scmp.ne.s32.totalorder %s206, %s208
      %p215 = scmp.eq.s32.totalorder %s30, 1
      %p216 = por %p214, %p215
      %p217 = scmp.ne.s32.totalorder %s208, %s209
      %p218 = scmp.eq.s32.totalorder %s30, 0
      %p219 = por %p217, %p218
      %p220 = scmp.ne.s32.totalorder %s208, %s209
      %p221 = scmp.eq.s32.totalorder %s31, 1
      %p222 = por %p220, %p221
      %p224 = scmp.ne.s32.totalorder %s209, %s223
      %p225 = scmp.eq.s32.totalorder %s31, 0
      %p226 = por %p224, %p225
      %s228 = sadd.s32 %s227, 1
      %p231 = scmp.eq.s32.totalorder %s25, 1
      %p232 = scmp.ne.s32.totalorder %s227, %s229
      %p233 = scmp.eq.s32.totalorder %s25, 0
      %p234 = por %p232, %p233
      %p235 = scmp.ne.s32.totalorder %s227, %s229
      %p236 = scmp.eq.s32.totalorder %s30, 1
      %p237 = por %p235, %p236
      %p238 = scmp.ne.s32.totalorder %s229, %s230
      %p239 = scmp.eq.s32.totalorder %s30, 0
      %p240 = por %p238, %p239
      %p241 = scmp.ne.s32.totalorder %s229, %s230
      %p242 = scmp.eq.s32.totalorder %s31, 1
      %p243 = por %p241, %p242
      %p245 = scmp.ne.s32.totalorder %s230, %s244
      %p246 = scmp.eq.s32.totalorder %s31, 0
      %p247 = por %p245, %p246
      %s249 = sadd.s32 %s248, 1
      %p252 = scmp.eq.s32.totalorder %s25, 1
      %p253 = scmp.ne.s32.totalorder %s248, %s250
      %p254 = scmp.eq.s32.totalorder %s25, 0
      %p255 = por %p253, %p254
      %p256 = scmp.ne.s32.totalorder %s248, %s250
      %p257 = scmp.eq.s32.totalorder %s30, 1
      %p258 = por %p256, %p257
      %p259 = scmp.ne.s32.totalorder %s250, %s251
      %p260 = scmp.eq.s32.totalorder %s30, 0
      %p261 = por %p259, %p260
      %p262 = scmp.ne.s32.totalorder %s250, %s251
      %p263 = scmp.eq.s32.totalorder %s31, 1
      %p264 = por %p262, %p263
      %p266 = scmp.ne.s32.totalorder %s251, %s265
      %p267 = scmp.eq.s32.totalorder %s31, 0
      %p268 = por %p266, %p267
      %s269 = ssub.s32 %s25, %s32
      %p270 = scmp.eq.s32.totalorder %s269, 0
      %s272 = sadd.s32 %s271, 1
      %s273 = scalar_select %p270, %s271, %s272
      %p276 = pneg %p270
      %p277 = scmp.eq.s32.totalorder %s25, 1
      %p278 = por %p276, %p277
      %p279 = scmp.ne.s32.totalorder %s271, %s274
      %p280 = scmp.eq.s32.totalorder %s25, 0
      %p281 = por %p279, %p280
      %p282 = scmp.ne.s32.totalorder %s271, %s274
      %p283 = scmp.eq.s32.totalorder %s30, 1
      %p284 = por %p282, %p283
      %p285 = scmp.ne.s32.totalorder %s274, %s275
      %p286 = scmp.eq.s32.totalorder %s30, 0
      %p287 = por %p285, %p286
      %p288 = scmp.ne.s32.totalorder %s274, %s275
      %p289 = scmp.eq.s32.totalorder %s31, 1
      %p290 = por %p288, %p289
      %p292 = scmp.ne.s32.totalorder %s275, %s291
      %p293 = scmp.eq.s32.totalorder %s31, 0
      %p294 = por %p292, %p293
      %p295 = scmp.le.s32.totalorder 1, %s25
      %p296 = scmp.lt.s32.totalorder %s25, 3
      %p297 = pnand %p295, %p296
      %p298 = pneg %p297
      // Predicated region
      $region9: #{tpu_custom_call.1} parent=5 // pred_check
        _
      $region10: #{tpu_custom_call.1} parent=5 // pred_check_branch
        %300 = sbr.rel (%p297) target = $region12
      $region11: #{tpu_custom_call.1} parent=5 // pred_region
        %s301 = ssub.s32 %s25, 1
        // Predicated region
        $region13: #{tpu_custom_call.1} parent=11 // pred_check
          %p302 = pneg %p72
        $region14: #{tpu_custom_call.1} parent=11 // pred_check_branch
          %304 = sbr.rel (%p302) target = $region16
        $region15: #{tpu_custom_call.1} parent=11 // pred_region
          %s306 = ssub.s32 6144, 6144
          %307 = vsyncadd [#allocation6], %s306
          %s308 = sshll.u32 [#allocation5], 4
          %s309 = int_to_ptr.vmem [resolvable:$true] %s308
          %314 = dma.hbm_to_vmem [thread:$0]  %s1, 6144, %s309, [#allocation6], 384, 384, 24
        $region16: #{tpu_custom_call.1} parent=11 // pred_fallthru
          _
        // Predicated region
        $region17: #{tpu_custom_call.1} parent=11 // pred_check
          %p315 = pneg %p93
        $region18: #{tpu_custom_call.1} parent=11 // pred_check_branch
          %317 = sbr.rel (%p315) target = $region20
        $region19: #{tpu_custom_call.1} parent=11 // pred_region
          %s319 = ssub.s32 48, 48
          %320 = vsyncadd [#allocation6], %s319
          %s322 = sshll.u32 [#allocation7], 4
          %s323 = int_to_ptr.vmem [resolvable:$true] %s322
          %325 = dma.hbm_to_vmem [thread:$0]  %s2, 48, %s323, [#allocation6]
        $region20: #{tpu_custom_call.1} parent=11 // pred_fallthru
          _
        // Predicated region
        $region21: #{tpu_custom_call.1} parent=11 // pred_check
          %p326 = pneg %p114
        $region22: #{tpu_custom_call.1} parent=11 // pred_check_branch
          %328 = sbr.rel (%p326) target = $region24
        $region23: #{tpu_custom_call.1} parent=11 // pred_region
          %s330 = ssub.s32 4096, 4096
          %331 = vsyncadd [#allocation9], %s330
          %s332 = sshll.u32 [#allocation8], 4
          %s333 = int_to_ptr.vmem [resolvable:$true] %s332
          %338 = dma.hbm_to_vmem [thread:$0]  %s3, 4096, %s333, [#allocation9], 256, 256, 16
        $region24: #{tpu_custom_call.1} parent=11 // pred_fallthru
          _
        // Predicated region
        $region25: #{tpu_custom_call.1} parent=11 // pred_check
          %p339 = pneg %p135
        $region26: #{tpu_custom_call.1} parent=11 // pred_check_branch
          %341 = sbr.rel (%p339) target = $region28
        $region27: #{tpu_custom_call.1} parent=11 // pred_region
          _
        $region28: #{tpu_custom_call.1} parent=11 // pred_fallthru
          _
        // Predicated region
        $region29: #{tpu_custom_call.1} parent=11 // pred_check
          %p342 = pneg %p156
        $region30: #{tpu_custom_call.1} parent=11 // pred_check_branch
          %344 = sbr.rel (%p342) target = $region32
        $region31: #{tpu_custom_call.1} parent=11 // pred_region
          %s346 = ssub.s32 10240, 10240
          %347 = vsyncadd [#allocation9], %s346
          %s348 = sshll.u32 [#allocation10], 4
          %s349 = int_to_ptr.vmem [resolvable:$true] %s348
          %354 = dma.hbm_to_vmem [thread:$0]  %s5, 10240, %s349, [#allocation9], 128, 128, 8
        $region32: #{tpu_custom_call.1} parent=11 // pred_fallthru
          _
        // Predicated region
        $region33: #{tpu_custom_call.1} parent=11 // pred_check
          %p355 = pneg %p177
        $region34: #{tpu_custom_call.1} parent=11 // pred_check_branch
          %357 = sbr.rel (%p355) target = $region36
        $region35: #{tpu_custom_call.1} parent=11 // pred_region
          _
        $region36: #{tpu_custom_call.1} parent=11 // pred_fallthru
          _
        // Predicated region
        $region37: #{tpu_custom_call.1} parent=11 // pred_check
          %p358 = pneg %p198
        $region38: #{tpu_custom_call.1} parent=11 // pred_check_branch
          %360 = sbr.rel (%p358) target = $region40
        $region39: #{tpu_custom_call.1} parent=11 // pred_region
          _
        $region40: #{tpu_custom_call.1} parent=11 // pred_fallthru
          _
        // Predicated region
        $region41: #{tpu_custom_call.1} parent=11 // pred_check
          %p361 = pneg %p219
        $region42: #{tpu_custom_call.1} parent=11 // pred_check_branch
          %363 = sbr.rel (%p361) target = $region44
        $region43: #{tpu_custom_call.1} parent=11 // pred_region
          _
        $region44: #{tpu_custom_call.1} parent=11 // pred_fallthru
          _
        // Predicated region
        $region45: #{tpu_custom_call.1} parent=11 // pred_check
          %p364 = pneg %p240
        $region46: #{tpu_custom_call.1} parent=11 // pred_check_branch
          %366 = sbr.rel (%p364) target = $region48
        $region47: #{tpu_custom_call.1} parent=11 // pred_region
          _
        $region48: #{tpu_custom_call.1} parent=11 // pred_fallthru
          _
        // Predicated region
        $region49: #{tpu_custom_call.1} parent=11 // pred_check
          %p367 = pneg %p261
        $region50: #{tpu_custom_call.1} parent=11 // pred_check_branch
          %369 = sbr.rel (%p367) target = $region52
        $region51: #{tpu_custom_call.1} parent=11 // pred_region
          _
        $region52: #{tpu_custom_call.1} parent=11 // pred_fallthru
          _
      $region12: #{tpu_custom_call.1} parent=5 // pred_fallthru
        _
      %p370 = scmp.lt.s32.totalorder %s25, 2
      // Predicated region
      $region53: #{tpu_custom_call.1} parent=5 // pred_check
        %p371 = pneg %p370
      $region54: #{tpu_custom_call.1} parent=5 // pred_check_branch
        %373 = sbr.rel (%p371) target = $region56
      $region55: #{tpu_custom_call.1} parent=5 // pred_region
        // Predicated region
        $region57: #{tpu_custom_call.1} parent=55 // pred_check
          %p374 = pneg %p45
        $region58: #{tpu_custom_call.1} parent=55 // pred_check_branch
          %376 = sbr.rel (%p374) target = $region60
        $region59: #{tpu_custom_call.1} parent=55 // pred_region
          %s377 = sand.u32 %s35, 1
          %s378 = scalar_lea.sflag [#allocation3], %s377
          %s379 = sand.u32 %s35, 1
          %s380 = smul.addr %s379, 8
          %s381 = scalar_lea.vmem [#allocation2], %s380
          %s383 = ssub.s32 128, 128
          %384 = vsyncadd %s378, %s383
          %s385 = smul.addr %s25, 128
          %s386 = scalar_lea.hbm %s0, %s385
          %s388 = sshll.u32 %s381, 4
          %s389 = int_to_ptr.vmem [resolvable:$true] %s388
          %391 = dma.hbm_to_vmem [thread:$0]  %s386, 128, %s389, %s378
        $region60: #{tpu_custom_call.1} parent=55 // pred_fallthru
          _
      $region56: #{tpu_custom_call.1} parent=5 // pred_fallthru
        _
      %p392 = scmp.le.s32.totalorder 1, %s25
      %p393 = scmp.lt.s32.totalorder %s25, 3
      %p394 = pnand %p392, %p393
      %p395 = pneg %p394
      // Predicated region
      $region61: #{tpu_custom_call.1} parent=5 // pred_check
        _
      $region62: #{tpu_custom_call.1} parent=5 // pred_check_branch
        %397 = sbr.rel (%p394) target = $region64
      $region63: #{tpu_custom_call.1} parent=5 // pred_region
        %s398 = ssub.s32 %s25, 1
        %s399 = sand.u32 %s38, 1
        %s400 = scalar_lea.sflag [#allocation3], %s399
        %s401 = sand.u32 %s38, 1
        %s402 = smul.addr %s401, 8
        %s403 = scalar_lea.vmem [#allocation2], %s402
        // Predicated region
        $region65: #{tpu_custom_call.1} parent=63 // pred_check
          %p404 = pneg %p51
        $region66: #{tpu_custom_call.1} parent=63 // pred_check_branch
          %406 = sbr.rel (%p404) target = $region68
        $region67: #{tpu_custom_call.1} parent=63 // pred_region
          %407 = dma.done %s400, 128
        $region68: #{tpu_custom_call.1} parent=63 // pred_fallthru
          _
        // Predicated region
        $region69: #{tpu_custom_call.1} parent=63 // pred_check
          %p408 = pneg %p72
        $region70: #{tpu_custom_call.1} parent=63 // pred_check_branch
          %410 = sbr.rel (%p408) target = $region72
        $region71: #{tpu_custom_call.1} parent=63 // pred_region
          %411 = dma.done [#allocation6], 6144
        $region72: #{tpu_custom_call.1} parent=63 // pred_fallthru
          _
        // Predicated region
        $region73: #{tpu_custom_call.1} parent=63 // pred_check
          %p412 = pneg %p93
        $region74: #{tpu_custom_call.1} parent=63 // pred_check_branch
          %414 = sbr.rel (%p412) target = $region76
        $region75: #{tpu_custom_call.1} parent=63 // pred_region
          %415 = dma.done [#allocation6], 48
        $region76: #{tpu_custom_call.1} parent=63 // pred_fallthru
          _
        // Predicated region
        $region77: #{tpu_custom_call.1} parent=63 // pred_check
          %p416 = pneg %p114
        $region78: #{tpu_custom_call.1} parent=63 // pred_check_branch
          %418 = sbr.rel (%p416) target = $region80
        $region79: #{tpu_custom_call.1} parent=63 // pred_region
          %419 = dma.done [#allocation9], 4096
        $region80: #{tpu_custom_call.1} parent=63 // pred_fallthru
          _
        // Predicated region
        $region81: #{tpu_custom_call.1} parent=63 // pred_check
          %p420 = pneg %p156
        $region82: #{tpu_custom_call.1} parent=63 // pred_check_branch
          %422 = sbr.rel (%p420) target = $region84
        $region83: #{tpu_custom_call.1} parent=63 // pred_region
          %423 = dma.done [#allocation9], 10240
        $region84: #{tpu_custom_call.1} parent=63 // pred_fallthru
          _
        %s424 = sand.u32 %s38, 1
        %s425 = scalar_lea.sflag [#allocation3], %s424
        %s426 = sand.u32 %s38, 1
        %s427 = smul.addr %s426, 8
        %s428 = scalar_lea.vmem [#allocation2], %s427
        %p429 = pneg %p51
        %p430 = pneg %p48
        %p431 = pneg %p72
        %p432 = pneg %p69
        %p433 = pneg %p93
        %p434 = pneg %p90
        %p435 = pneg %p114
        %p436 = pneg %p111
        %p437 = pneg %p135
        %p438 = pneg %p132
        %p439 = pneg %p156
        %p440 = pneg %p153
        %p441 = pneg %p177
        %p442 = pneg %p174
        %p443 = pneg %p198
        %p444 = pneg %p195
        %p445 = pneg %p219
        %p446 = pneg %p216
        %p447 = pneg %p240
        %p448 = pneg %p237
        %p449 = pneg %p261
        %p450 = pneg %p258
        %p451 = pneg %p287
        %p452 = pneg %p284
        %s453 = sand.u32 %s274, 1
        %s454 = scalar_lea.sflag [#allocation4], %s453
        %s455 = sand.u32 %s274, 1
        %s456 = smul.addr %s455, 8
        %s457 = scalar_lea.vmem [#allocation11], %s456
        %v458 = vld [vmem:[%s403] sm:$0xff]
        %v459 = vld [vmem:[#allocation5] sm:$0xff]
        %v460 = vld [vmem:[#allocation5 + $0x8] sm:$0xff]
        %v461 = vld [vmem:[#allocation5 + $0x10] sm:$0xff]
        %v462 = vld [vmem:[#allocation5 + $0x18] sm:$0xff]
        %v463 = vld [vmem:[#allocation5 + $0x20] sm:$0xff]
        %v464 = vld [vmem:[#allocation5 + $0x28] sm:$0xff]
        %v465 = vld [vmem:[#allocation5 + $0x30] sm:$0xff]
        %v466 = vld [vmem:[#allocation5 + $0x38] sm:$0xff]
        %v467 = vld [vmem:[#allocation5 + $0x40] sm:$0xff]
        %v468 = vld [vmem:[#allocation5 + $0x48] sm:$0xff]
        %v469 = vld [vmem:[#allocation5 + $0x50] sm:$0xff]
        %v470 = vld [vmem:[#allocation5 + $0x58] sm:$0xff]
        %v471 = vld [vmem:[#allocation5 + $0x60] sm:$0xff]
        %v472 = vld [vmem:[#allocation5 + $0x68] sm:$0xff]
        %v473 = vld [vmem:[#allocation5 + $0x70] sm:$0xff]
        %v474 = vld [vmem:[#allocation5 + $0x78] sm:$0xff]
        %v475 = vld [vmem:[#allocation5 + $0x80] sm:$0xff]
        %v476 = vld [vmem:[#allocation5 + $0x88] sm:$0xff]
        %v477 = vld [vmem:[#allocation5 + $0x90] sm:$0xff]
        %v478 = vld [vmem:[#allocation5 + $0x98] sm:$0xff]
        %v479 = vld [vmem:[#allocation5 + $0xa0] sm:$0xff]
        %v480 = vld [vmem:[#allocation5 + $0xa8] sm:$0xff]
        %v481 = vld [vmem:[#allocation5 + $0xb0] sm:$0xff]
        %v482 = vld [vmem:[#allocation5 + $0xb8] sm:$0xff]
        %v483 = vld [vmem:[#allocation5 + $0xc0] sm:$0xff]
        %v484 = vld [vmem:[#allocation5 + $0xc8] sm:$0xff]
        %v485 = vld [vmem:[#allocation5 + $0xd0] sm:$0xff]
        %v486 = vld [vmem:[#allocation5 + $0xd8] sm:$0xff]
        %v487 = vld [vmem:[#allocation5 + $0xe0] sm:$0xff]
        %v488 = vld [vmem:[#allocation5 + $0xe8] sm:$0xff]
        %v489 = vld [vmem:[#allocation5 + $0xf0] sm:$0xff]
        %v490 = vld [vmem:[#allocation5 + $0xf8] sm:$0xff]
        %v491 = vld [vmem:[#allocation5 + $0x100] sm:$0xff]
        %v492 = vld [vmem:[#allocation5 + $0x108] sm:$0xff]
        %v493 = vld [vmem:[#allocation5 + $0x110] sm:$0xff]
        %v494 = vld [vmem:[#allocation5 + $0x118] sm:$0xff]
        %v495 = vld [vmem:[#allocation5 + $0x120] sm:$0xff]
        %v496 = vld [vmem:[#allocation5 + $0x128] sm:$0xff]
        %v497 = vld [vmem:[#allocation5 + $0x130] sm:$0xff]
        %v498 = vld [vmem:[#allocation5 + $0x138] sm:$0xff]
        %v499 = vld [vmem:[#allocation5 + $0x140] sm:$0xff]
        %v500 = vld [vmem:[#allocation5 + $0x148] sm:$0xff]
        %v501 = vld [vmem:[#allocation5 + $0x150] sm:$0xff]
        %v502 = vld [vmem:[#allocation5 + $0x158] sm:$0xff]
        %v503 = vld [vmem:[#allocation5 + $0x160] sm:$0xff]
        %v504 = vld [vmem:[#allocation5 + $0x168] sm:$0xff]
        %v505 = vld [vmem:[#allocation5 + $0x170] sm:$0xff]
        %v506 = vld [vmem:[#allocation5 + $0x178] sm:$0xff]
        %v507 = vld [vmem:[#allocation7] sm:$0x7]
        %v509 = vlaneseq
        %v510 = vshrl.u32 %v509, 7
        %v511 = vsub.s32 0, %v510
        %v512 = vrot.slane %v507, %v511
        %v513 = vlaneseq
        %v514 = vshrl.u32 %v513, 7
        %v515 = vsub.s32 1, %v514
        %v516 = vrot.slane %v507, %v515
        %v517 = vlaneseq
        %v518 = vshrl.u32 %v517, 7
        %v519 = vsub.s32 2, %v518
        %v520 = vrot.slane %v507, %v519
        %524 = vmatprep.subr.mxu0 %v460
        %525 = vmatpush1.msra.mxu0 %v459
        %526 = vmatprep.subr.mxu0 %v463
        %527 = vmatpush1.msra.mxu0 %v462
        %528 = vmatprep.subr.mxu0 %v466
        %529 = vmatpush1.msra.mxu0 %v465
        %530 = vmatprep.subr.mxu0 %v469
        %531 = vmatpush1.msra.mxu0 %v468
        %532 = vmatprep.subr.mxu0 %v472
        %533 = vmatpush1.msra.mxu0 %v471
        %534 = vmatprep.subr.mxu0 %v475
        %535 = vmatpush1.msra.mxu0 %v474
        %536 = vmatprep.subr.mxu0 %v478
        %537 = vmatpush1.msra.mxu0 %v477
        %538 = vmatprep.subr.mxu0 %v481
        %539 = vmatpush1.msra.mxu0 %v480
        %540 = vmatprep.subr.mxu0 %v484
        %541 = vmatpush1.msra.mxu0 %v483
        %542 = vmatprep.subr.mxu0 %v487
        %543 = vmatpush1.msra.mxu0 %v486
        %544 = vmatprep.subr.mxu0 %v490
        %545 = vmatpush1.msra.mxu0 %v489
        %546 = vmatprep.subr.mxu0 %v493
        %547 = vmatpush1.msra.mxu0 %v492
        %548 = vmatprep.subr.mxu0 %v496
        %549 = vmatpush1.msra.mxu0 %v495
        %550 = vmatprep.subr.mxu0 %v499
        %551 = vmatpush1.msra.mxu0 %v498
        %552 = vmatprep.subr.mxu0 %v502
        %553 = vmatpush1.msra.mxu0 %v501
        %554 = vmatprep.subr.mxu0 %v505
        %555 = vmatpush1.msra.mxu0 %v504
        %556 = vmatprep.subr.mxu0 0.0
        %557 = vmatpush1.msra.mxu0 0.0
        %558 = vmatprep.subr.mxu0 0.0
        %559 = vmatpush1.msra.mxu0 0.0
        %560 = vmatprep.subr.mxu0 0.0
        %561 = vmatpush1.msra.mxu0 0.0
        %562 = vmatprep.subr.mxu0 0.0
        %563 = vmatpush1.msra.mxu0 0.0
        %564 = vmatprep.subr.mxu0 0.0
        %565 = vmatpush1.msra.mxu0 0.0
        %566 = vmatprep.subr.mxu0 0.0
        %567 = vmatpush1.msra.mxu0 0.0
        %568 = vmatprep.subr.mxu0 0.0
        %569 = vmatpush1.msra.mxu0 0.0
        %570 = vmatprep.subr.mxu0 0.0
        %571 = vmatpush1.msra.mxu0 0.0
        %572 = vmatprep.subr.mxu0 0.0
        %573 = vmatpush1.msra.mxu0 0.0
        %574 = vmatprep.subr.mxu0 0.0
        %575 = vmatpush1.msra.mxu0 0.0
        %576 = vmatprep.subr.mxu0 0.0
        %577 = vmatpush1.msra.mxu0 0.0
        %578 = vmatprep.subr.mxu0 0.0
        %579 = vmatpush1.msra.mxu0 0.0
        %580 = vmatprep.subr.mxu0 0.0
        %581 = vmatpush1.msra.mxu0 0.0
        %582 = vmatprep.subr.mxu0 0.0
        %583 = vmatpush1.msra.mxu0 0.0
        %584 = vmatprep.subr.mxu0 0.0
        %585 = vmatpush1.msra.mxu0 0.0
        %586 = vmatprep.subr.mxu0 0.0
        %587 = vmatpush1.msra.mxu0 0.0
        %588 = vmatprep.mubr.f32.mxu0 0.0
        %589 = vmatmul.mubr.f32.gmra.mrb[0].mxu0 %v458
        %v590 = vpop.f32.mrb[0].mxu0
        %v591 = vadd.f32 %v512, %v590
        %v592 = vpop.f32.mrb[0].mxu0
        %v593 = vadd.f32 %v516, %v592
        %594 = vdwg.mxu0
        %595 = vmatprep.subr.mxu0 0.0
        %596 = vmatpush1.msra.mxu0 %v461
        %597 = vmatprep.subr.mxu0 0.0
        %598 = vmatpush1.msra.mxu0 %v464
        %599 = vmatprep.subr.mxu0 0.0
        %600 = vmatpush1.msra.mxu0 %v467
        %601 = vmatprep.subr.mxu0 0.0
        %602 = vmatpush1.msra.mxu0 %v470
        %603 = vmatprep.subr.mxu0 0.0
        %604 = vmatpush1.msra.mxu0 %v473
        %605 = vmatprep.subr.mxu0 0.0
        %606 = vmatpush1.msra.mxu0 %v476
        %607 = vmatprep.subr.mxu0 0.0
        %608 = vmatpush1.msra.mxu0 %v479
        %609 = vmatprep.subr.mxu0 0.0
        %610 = vmatpush1.msra.mxu0 %v482
        %611 = vmatprep.subr.mxu0 0.0
        %612 = vmatpush1.msra.mxu0 %v485
        %613 = vmatprep.subr.mxu0 0.0
        %614 = vmatpush1.msra.mxu0 %v488
        %615 = vmatprep.subr.mxu0 0.0
        %616 = vmatpush1.msra.mxu0 %v491
        %617 = vmatprep.subr.mxu0 0.0
        %618 = vmatpush1.msra.mxu0 %v494
        %619 = vmatprep.subr.mxu0 0.0
        %620 = vmatpush1.msra.mxu0 %v497
        %621 = vmatprep.subr.mxu0 0.0
        %622 = vmatpush1.msra.mxu0 %v500
        %623 = vmatprep.subr.mxu0 0.0
        %624 = vmatpush1.msra.mxu0 %v503
        %625 = vmatprep.subr.mxu0 0.0
        %626 = vmatpush1.msra.mxu0 %v506
        %627 = vmatprep.subr.mxu0 0.0
        %628 = vmatpush1.msra.mxu0 0.0
        %629 = vmatprep.subr.mxu0 0.0
        %630 = vmatpush1.msra.mxu0 0.0
        %631 = vmatprep.subr.mxu0 0.0
        %632 = vmatpush1.msra.mxu0 0.0
        %633 = vmatprep.subr.mxu0 0.0
        %634 = vmatpush1.msra.mxu0 0.0
        %635 = vmatprep.subr.mxu0 0.0
        %636 = vmatpush1.msra.mxu0 0.0
        %637 = vmatprep.subr.mxu0 0.0
        %638 = vmatpush1.msra.mxu0 0.0
        %639 = vmatprep.subr.mxu0 0.0
        %640 = vmatpush1.msra.mxu0 0.0
        %641 = vmatprep.subr.mxu0 0.0
        %642 = vmatpush1.msra.mxu0 0.0
        %643 = vmatprep.subr.mxu0 0.0
        %644 = vmatpush1.msra.mxu0 0.0
        %645 = vmatprep.subr.mxu0 0.0
        %646 = vmatpush1.msra.mxu0 0.0
        %647 = vmatprep.subr.mxu0 0.0
        %648 = vmatpush1.msra.mxu0 0.0
        %649 = vmatprep.subr.mxu0 0.0
        %650 = vmatpush1.msra.mxu0 0.0
        %651 = vmatprep.subr.mxu0 0.0
        %652 = vmatpush1.msra.mxu0 0.0
        %653 = vmatprep.subr.mxu0 0.0
        %654 = vmatpush1.msra.mxu0 0.0
        %655 = vmatprep.subr.mxu0 0.0
        %656 = vmatpush1.msra.mxu0 0.0
        %657 = vmatprep.subr.mxu0 0.0
        %658 = vmatpush1.msra.mxu0 0.0
        %659 = vmatprep.mubr.f32.mxu0 0.0
        %660 = vmatmul.mubr.f32.gmra.mrb[0].mxu0 %v458
        %v661 = vpop.f32.mrb[0].mxu0
        %v662 = vadd.f32 %v520, %v661
        %v663 = vpop.f32.mrb[0].mxu0
        %664 = vdwg.mxu0
        %v665 = vxor.u32 %v662, 2147483648
        %v666 = vmul.f32 %v665, 1.442695
        %v667 = vpow.pop %v666
        %v668 = vadd.f32 %v667, 1.0
        %v669 = vrcp.pop %v668
        %v670 = vmul.f32 1.0, %v669
        %v671 = vmul.f32 %v593, %v670
        %v672 = vand.u32 2147483647, %v591
        %vm673 = vcmp.le.f32.partialorder %v672, 0.7853982
        %vm674 = vcmp.lt.s32.totalorder %v591, 0
        %v675 = vand.u32 %v591, 2139095040
        %v676 = vshrl.u32 %v675, 23
        %v677 = vsub.s32 %v676, 127
        %v678 = vand.u32 2147483647, %v591
        %v679 = vand.u32 %v678, 8388607
        %v680 = vor.u32 %v679, 8388608
        %v681 = vsub.s32 0, %v680
        %v682 = vadd.s32 %v677, 1
        %vm683 = vcmp.gt.s32.totalorder %v682, 0
        %v684 = vsel %vm683, %v682, 0
        %v685 = vshrl.u32 %v684, 5
        %v686 = vand.u32 %v684, 31
        %v687 = vsub.s32 32, %v686
        %v688 = vshrl.u32 683565275, %v687
        %v689 = vshll.u32 683565275, %v686
        %v690 = vshrl.u32 2475754826, %v687
        %v691 = vor.u32 %v689, %v690
        %v692 = vshll.u32 2475754826, %v686
        %v693 = vshrl.u32 2131351028, %v687
        %v694 = vor.u32 %v692, %v693
        %v695 = vshll.u32 2131351028, %v686
        %v696 = vshrl.u32 2102212464, %v687
        %v697 = vor.u32 %v695, %v696
        %v698 = vshll.u32 2102212464, %v686
        %v699 = vshrl.u32 920167782, %v687
        %v700 = vor.u32 %v698, %v699
        %v701 = vshll.u32 920167782, %v686
        %v702 = vshrl.u32 1326507024, %v687
        %v703 = vor.u32 %v701, %v702
        %vm704 = vcmp.lt.s32.totalorder %v685, 1
        %vm705 = vcmp.lt.s32.totalorder %v685, 2
        %vm706 = vcmp.lt.s32.totalorder %v685, 3
        %vm707 = vcmp.lt.s32.totalorder %v685, 4
        %v708 = vsel %vm704, %v688, %v691
        %v709 = vsel %vm707, %v697, 2102212464
        %v710 = vsel %vm706, %v694, %v709
        %v711 = vsel %vm705, %v708, %v710
        %v712 = vsel %vm704, %v691, %v694
        %v713 = vsel %vm707, %v700, 920167782
        %v714 = vsel %vm706, %v697, %v713
        %v715 = vsel %vm705, %v712, %v714
        %v716 = vsel %vm704, %v694, %v697
        %v717 = vsel %vm707, %v703, 1326507024
        %v718 = vsel %vm706, %v700, %v717
        %v719 = vsel %vm705, %v716, %v718
        %v720 = vshll.u32 %v680, 8
        %v721 = vmul.u32.u64.compose %v720, %v719
        %v722 = vextract.low.u32 %v721
        %v723 = vextract.high.u32 %v721
        %v724 = vmul.u32.u64.compose %v720, %v715
        %v725 = vextract.low.u32 %v724
        %v726 = vextract.high.u32 %v724
        %v727 = vmul.u32 %v720, %v711
        %v728 = vadd.s32 %v723, %v725
        %vm729 = vc.u32 %v723, %v725
        %v730 = vadd.s32 %v726, 1
        %v731 = vsel %vm729, %v730, %v726
        %v732 = vadd.s32 %v727, %v731
        %v733 = vadd.s32 %v732, 536870912
        %v734 = vshrl.u32 %v733, 30
        %v735 = vshll.u32 %v734, 30
        %v736 = vsub.s32 %v732, %v735
        %vm737 = vcmp.lt.s32.totalorder %v736, 0
        %v738 = vsub.s32 0, %v736
        %v739 = vsel %vm737, %v738, %v736
        %v740 = vclz %v739
        %v741 = vsub.s32 %v740, 2
        %vm742 = vcmp.gt.s32.totalorder 0, %v741
        %v743 = vsel %vm742, 0, %v741
        %v744 = vsub.s32 32, %v743
        %v745 = vshll.u32 %v736, %v743
        %v746 = vshrl.u32 %v728, %v744
        %v747 = vor.u32 %v745, %v746
        %v748 = vsub.s32 4294967266, %v743
        %v749 = vadd.s32 %v748, 127
        %v750 = vshll.u32 %v749, 23
        %v751 = vor.u32 4788187, %v750
        %v752 = vand.u32 2147483647, %v751
        %v754 = vcvt.s32.f32 %v747
        %v755 = vmul.f32 %v754, %v752
        %v756 = vxor.u32 %v755, 2147483648
        %v757 = vsel %vm674, %v756, %v755
        %v758 = vsub.s32 4, %v734
        %v759 = vsel %vm674, %v758, %v734
        %v760 = vsel %vm673, %v591, %v757
        %v761 = vsel %vm673, 0, %v759
        %v762 = vcosq.f32.pop %v760
        %v763 = vsinq.f32.pop %v760
        %vm764 = vweird.f32 %v591
        %v765 = vadd.s32 %v761, 3
        %v766 = vand.u32 %v765, 3
        %vm767 = vcmp.lt.s32.totalorder %v766, 2
        %vm768 = vcmp.eq.s32.totalorder %v766, 0
        %v769 = vxor.u32 %v763, 2147483648
        %v770 = vsel %vm768, %v762, %v769
        %vm771 = vcmp.eq.s32.totalorder %v766, 2
        %v772 = vxor.u32 %v762, 2147483648
        %v773 = vsel %vm771, %v772, %v763
        %v774 = vsel %vm767, %v770, %v773
        %v775 = vsel %vm764, nan, %v774
        %v776 = vld [vmem:[#allocation10] sm:$0xff]
        %v777 = vld [vmem:[#allocation10 + $0x8] sm:$0xff]
        %v778 = vld [vmem:[#allocation10 + $0x10] sm:$0xff]
        %v779 = vld [vmem:[#allocation10 + $0x18] sm:$0xff]
        %v780 = vld [vmem:[#allocation10 + $0x20] sm:$0xff]
        %v781 = vld [vmem:[#allocation10 + $0x28] sm:$0xff]
        %v782 = vld [vmem:[#allocation10 + $0x30] sm:$0xff]
        %v783 = vld [vmem:[#allocation10 + $0x38] sm:$0xff]
        %v784 = vld [vmem:[#allocation10 + $0x40] sm:$0xff]
        %v785 = vld [vmem:[#allocation10 + $0x48] sm:$0xff]
        %v786 = vld [vmem:[#allocation10 + $0x50] sm:$0xff]
        %v787 = vld [vmem:[#allocation10 + $0x58] sm:$0xff]
        %v788 = vld [vmem:[#allocation10 + $0x60] sm:$0xff]
        %v789 = vld [vmem:[#allocation10 + $0x68] sm:$0xff]
        %v790 = vld [vmem:[#allocation10 + $0x70] sm:$0xff]
        %v791 = vld [vmem:[#allocation10 + $0x78] sm:$0xff]
        %v792 = vld [vmem:[%s6] sm:$0x1]
        %v793 = vlaneseq
        %v794 = vshrl.u32 %v793, 7
        %v795 = vsub.s32 0, %v794
        %v796 = vrot.slane %v792, %v795
        %797 = vmatprep.subr.mxu0 0.0
        %798 = vmatpush1.msra.mxu0 %v776
        %799 = vmatprep.subr.mxu0 0.0
        %800 = vmatpush1.msra.mxu0 %v777
        %801 = vmatprep.subr.mxu0 0.0
        %802 = vmatpush1.msra.mxu0 %v778
        %803 = vmatprep.subr.mxu0 0.0
        %804 = vmatpush1.msra.mxu0 %v779
        %805 = vmatprep.subr.mxu0 0.0
        %806 = vmatpush1.msra.mxu0 %v780
        %807 = vmatprep.subr.mxu0 0.0
        %808 = vmatpush1.msra.mxu0 %v781
        %809 = vmatprep.subr.mxu0 0.0
        %810 = vmatpush1.msra.mxu0 %v782
        %811 = vmatprep.subr.mxu0 0.0
        %812 = vmatpush1.msra.mxu0 %v783
        %813 = vmatprep.subr.mxu0 0.0
        %814 = vmatpush1.msra.mxu0 %v784
        %815 = vmatprep.subr.mxu0 0.0
        %816 = vmatpush1.msra.mxu0 %v785
        %817 = vmatprep.subr.mxu0 0.0
        %818 = vmatpush1.msra.mxu0 %v786
        %819 = vmatprep.subr.mxu0 0.0
        %820 = vmatpush1.msra.mxu0 %v787
        %821 = vmatprep.subr.mxu0 0.0
        %822 = vmatpush1.msra.mxu0 %v788
        %823 = vmatprep.subr.mxu0 0.0
        %824 = vmatpush1.msra.mxu0 %v789
        %825 = vmatprep.subr.mxu0 0.0
        %826 = vmatpush1.msra.mxu0 %v790
        %827 = vmatprep.subr.mxu0 0.0
        %828 = vmatpush1.msra.mxu0 %v791
        %829 = vmatprep.subr.mxu0 0.0
        %830 = vmatpush1.msra.mxu0 0.0
        %831 = vmatprep.subr.mxu0 0.0
        %832 = vmatpush1.msra.mxu0 0.0
        %833 = vmatprep.subr.mxu0 0.0
        %834 = vmatpush1.msra.mxu0 0.0
        %835 = vmatprep.subr.mxu0 0.0
        %836 = vmatpush1.msra.mxu0 0.0
        %837 = vmatprep.subr.mxu0 0.0
        %838 = vmatpush1.msra.mxu0 0.0
        %839 = vmatprep.subr.mxu0 0.0
        %840 = vmatpush1.msra.mxu0 0.0
        %841 = vmatprep.subr.mxu0 0.0
        %842 = vmatpush1.msra.mxu0 0.0
        %843 = vmatprep.subr.mxu0 0.0
        %844 = vmatpush1.msra.mxu0 0.0
        %845 = vmatprep.subr.mxu0 0.0
        %846 = vmatpush1.msra.mxu0 0.0
        %847 = vmatprep.subr.mxu0 0.0
        %848 = vmatpush1.msra.mxu0 0.0
        %849 = vmatprep.subr.mxu0 0.0
        %850 = vmatpush1.msra.mxu0 0.0
        %851 = vmatprep.subr.mxu0 0.0
        %852 = vmatpush1.msra.mxu0 0.0
        %853 = vmatprep.subr.mxu0 0.0
        %854 = vmatpush1.msra.mxu0 0.0
        %855 = vmatprep.subr.mxu0 0.0
        %856 = vmatpush1.msra.mxu0 0.0
        %857 = vmatprep.subr.mxu0 0.0
        %858 = vmatpush1.msra.mxu0 0.0
        %859 = vmatprep.subr.mxu0 0.0
        %860 = vmatpush1.msra.mxu0 0.0
        %861 = vmatprep.mubr.f32.mxu0 0.0
        %862 = vmatmul.mubr.f32.gmra.mrb[0].mxu0 %v775
        %v863 = vpop.f32.mrb[0].mxu0
        %v864 = vadd.f32 %v796, %v863
        %v865 = vpop.f32.mrb[0].mxu0
        %866 = vdwg.mxu0
        %s867 = scalar_lea.vmem [#allocation10], 256
        %v868 = vld [vmem:[%s867] sm:$0xff]
        %v869 = vld [vmem:[%s867 + $0x8] sm:$0xff]
        %v870 = vld [vmem:[%s867 + $0x10] sm:$0xff]
        %v871 = vld [vmem:[%s867 + $0x18] sm:$0xff]
        %v872 = vld [vmem:[%s867 + $0x20] sm:$0xff]
        %v873 = vld [vmem:[%s867 + $0x28] sm:$0xff]
        %v874 = vld [vmem:[%s867 + $0x30] sm:$0xff]
        %v875 = vld [vmem:[%s867 + $0x38] sm:$0xff]
        %v876 = vld [vmem:[%s867 + $0x40] sm:$0xff]
        %v877 = vld [vmem:[%s867 + $0x48] sm:$0xff]
        %v878 = vld [vmem:[%s867 + $0x50] sm:$0xff]
        %v879 = vld [vmem:[%s867 + $0x58] sm:$0xff]
        %v880 = vld [vmem:[%s867 + $0x60] sm:$0xff]
        %v881 = vld [vmem:[%s867 + $0x68] sm:$0xff]
        %v882 = vld [vmem:[%s867 + $0x70] sm:$0xff]
        %v883 = vld [vmem:[%s867 + $0x78] sm:$0xff]
        %v884 = vld [vmem:[%s6 + $0x2] sm:$0x1]
        %v885 = vlaneseq
        %v886 = vshrl.u32 %v885, 7
        %v887 = vsub.s32 0, %v886
        %v888 = vrot.slane %v884, %v887
        %889 = vmatprep.subr.mxu0 0.0
        %890 = vmatpush1.msra.mxu0 %v868
        %891 = vmatprep.subr.mxu0 0.0
        %892 = vmatpush1.msra.mxu0 %v869
        %893 = vmatprep.subr.mxu0 0.0
        %894 = vmatpush1.msra.mxu0 %v870
        %895 = vmatprep.subr.mxu0 0.0
        %896 = vmatpush1.msra.mxu0 %v871
        %897 = vmatprep.subr.mxu0 0.0
        %898 = vmatpush1.msra.mxu0 %v872
        %899 = vmatprep.subr.mxu0 0.0
        %900 = vmatpush1.msra.mxu0 %v873
        %901 = vmatprep.subr.mxu0 0.0
        %902 = vmatpush1.msra.mxu0 %v874
        %903 = vmatprep.subr.mxu0 0.0
        %904 = vmatpush1.msra.mxu0 %v875
        %905 = vmatprep.subr.mxu0 0.0
        %906 = vmatpush1.msra.mxu0 %v876
        %907 = vmatprep.subr.mxu0 0.0
        %908 = vmatpush1.msra.mxu0 %v877
        %909 = vmatprep.subr.mxu0 0.0
        %910 = vmatpush1.msra.mxu0 %v878
        %911 = vmatprep.subr.mxu0 0.0
        %912 = vmatpush1.msra.mxu0 %v879
        %913 = vmatprep.subr.mxu0 0.0
        %914 = vmatpush1.msra.mxu0 %v880
        %915 = vmatprep.subr.mxu0 0.0
        %916 = vmatpush1.msra.mxu0 %v881
        %917 = vmatprep.subr.mxu0 0.0
        %918 = vmatpush1.msra.mxu0 %v882
        %919 = vmatprep.subr.mxu0 0.0
        %920 = vmatpush1.msra.mxu0 %v883
        %921 = vmatprep.subr.mxu0 0.0
        %922 = vmatpush1.msra.mxu0 0.0
        %923 = vmatprep.subr.mxu0 0.0
        %924 = vmatpush1.msra.mxu0 0.0
        %925 = vmatprep.subr.mxu0 0.0
        %926 = vmatpush1.msra.mxu0 0.0
        %927 = vmatprep.subr.mxu0 0.0
        %928 = vmatpush1.msra.mxu0 0.0
        %929 = vmatprep.subr.mxu0 0.0
        %930 = vmatpush1.msra.mxu0 0.0
        %931 = vmatprep.subr.mxu0 0.0
        %932 = vmatpush1.msra.mxu0 0.0
        %933 = vmatprep.subr.mxu0 0.0
        %934 = vmatpush1.msra.mxu0 0.0
        %935 = vmatprep.subr.mxu0 0.0
        %936 = vmatpush1.msra.mxu0 0.0
        %937 = vmatprep.subr.mxu0 0.0
        %938 = vmatpush1.msra.mxu0 0.0
        %939 = vmatprep.subr.mxu0 0.0
        %940 = vmatpush1.msra.mxu0 0.0
        %941 = vmatprep.subr.mxu0 0.0
        %942 = vmatpush1.msra.mxu0 0.0
        %943 = vmatprep.subr.mxu0 0.0
        %944 = vmatpush1.msra.mxu0 0.0
        %945 = vmatprep.subr.mxu0 0.0
        %946 = vmatpush1.msra.mxu0 0.0
        %947 = vmatprep.subr.mxu0 0.0
        %948 = vmatpush1.msra.mxu0 0.0
        %949 = vmatprep.subr.mxu0 0.0
        %950 = vmatpush1.msra.mxu0 0.0
        %951 = vmatprep.subr.mxu0 0.0
        %952 = vmatpush1.msra.mxu0 0.0
        %953 = vmatprep.mubr.f32.mxu0 0.0
        %954 = vmatmul.mubr.f32.gmra.mrb[0].mxu0 %v671
        %v955 = vpop.f32.mrb[0].mxu0
        %v956 = vadd.f32 %v888, %v955
        %v957 = vpop.f32.mrb[0].mxu0
        %958 = vdwg.mxu0
        %v959 = vand.u32 2147483647, %v956
        %vm960 = vcmp.le.f32.partialorder %v959, 0.7853982
        %vm961 = vcmp.lt.s32.totalorder %v956, 0
        %v962 = vand.u32 %v956, 2139095040
        %v963 = vshrl.u32 %v962, 23
        %v964 = vsub.s32 %v963, 127
        %v965 = vand.u32 2147483647, %v956
        %v966 = vand.u32 %v965, 8388607
        %v967 = vor.u32 %v966, 8388608
        %v968 = vsub.s32 0, %v967
        %v969 = vadd.s32 %v964, 1
        %vm970 = vcmp.gt.s32.totalorder %v969, 0
        %v971 = vsel %vm970, %v969, 0
        %v972 = vshrl.u32 %v971, 5
        %v973 = vand.u32 %v971, 31
        %v974 = vsub.s32 32, %v973
        %v975 = vshrl.u32 683565275, %v974
        %v976 = vshll.u32 683565275, %v973
        %v977 = vshrl.u32 2475754826, %v974
        %v978 = vor.u32 %v976, %v977
        %v979 = vshll.u32 2475754826, %v973
        %v980 = vshrl.u32 2131351028, %v974
        %v981 = vor.u32 %v979, %v980
        %v982 = vshll.u32 2131351028, %v973
        %v983 = vshrl.u32 2102212464, %v974
        %v984 = vor.u32 %v982, %v983
        %v985 = vshll.u32 2102212464, %v973
        %v986 = vshrl.u32 920167782, %v974
        %v987 = vor.u32 %v985, %v986
        %v988 = vshll.u32 920167782, %v973
        %v989 = vshrl.u32 1326507024, %v974
        %v990 = vor.u32 %v988, %v989
        %vm991 = vcmp.lt.s32.totalorder %v972, 1
        %vm992 = vcmp.lt.s32.totalorder %v972, 2
        %vm993 = vcmp.lt.s32.totalorder %v972, 3
        %vm994 = vcmp.lt.s32.totalorder %v972, 4
        %v995 = vsel %vm991, %v975, %v978
        %v996 = vsel %vm994, %v984, 2102212464
        %v997 = vsel %vm993, %v981, %v996
        %v998 = vsel %vm992, %v995, %v997
        %v999 = vsel %vm991, %v978, %v981
        %v1000 = vsel %vm994, %v987, 920167782
        %v1001 = vsel %vm993, %v984, %v1000
        %v1002 = vsel %vm992, %v999, %v1001
        %v1003 = vsel %vm991, %v981, %v984
        %v1004 = vsel %vm994, %v990, 1326507024
        %v1005 = vsel %vm993, %v987, %v1004
        %v1006 = vsel %vm992, %v1003, %v1005
        %v1007 = vshll.u32 %v967, 8
        %v1008 = vmul.u32.u64.compose %v1007, %v1006
        %v1009 = vextract.low.u32 %v1008
        %v1010 = vextract.high.u32 %v1008
        %v1011 = vmul.u32.u64.compose %v1007, %v1002
        %v1012 = vextract.low.u32 %v1011
        %v1013 = vextract.high.u32 %v1011
        %v1014 = vmul.u32 %v1007, %v998
        %v1015 = vadd.s32 %v1010, %v1012
        %vm1016 = vc.u32 %v1010, %v1012
        %v1017 = vadd.s32 %v1013, 1
        %v1018 = vsel %vm1016, %v1017, %v1013
        %v1019 = vadd.s32 %v1014, %v1018
        %v1020 = vadd.s32 %v1019, 536870912
        %v1021 = vshrl.u32 %v1020, 30
        %v1022 = vshll.u32 %v1021, 30
        %v1023 = vsub.s32 %v1019, %v1022
        %vm1024 = vcmp.lt.s32.totalorder %v1023, 0
        %v1025 = vsub.s32 0, %v1023
        %v1026 = vsel %vm1024, %v1025, %v1023
        %v1027 = vclz %v1026
        %v1028 = vsub.s32 %v1027, 2
        %vm1029 = vcmp.gt.s32.totalorder 0, %v1028
        %v1030 = vsel %vm1029, 0, %v1028
        %v1031 = vsub.s32 32, %v1030
        %v1032 = vshll.u32 %v1023, %v1030
        %v1033 = vshrl.u32 %v1015, %v1031
        %v1034 = vor.u32 %v1032, %v1033
        %v1035 = vsub.s32 4294967266, %v1030
        %v1036 = vadd.s32 %v1035, 127
        %v1037 = vshll.u32 %v1036, 23
        %v1038 = vor.u32 4788187, %v1037
        %v1039 = vand.u32 2147483647, %v1038
        %v1041 = vcvt.s32.f32 %v1034
        %v1042 = vmul.f32 %v1041, %v1039
        %v1043 = vxor.u32 %v1042, 2147483648
        %v1044 = vsel %vm961, %v1043, %v1042
        %v1045 = vsub.s32 4, %v1021
        %v1046 = vsel %vm961, %v1045, %v1021
        %v1047 = vsel %vm960, %v956, %v1044
        %v1048 = vsel %vm960, 0, %v1046
        %v1049 = vcosq.f32.pop %v1047
        %v1050 = vsinq.f32.pop %v1047
        %vm1051 = vweird.f32 %v956
        %v1052 = vadd.s32 %v1048, 3
        %v1053 = vand.u32 %v1052, 3
        %vm1054 = vcmp.lt.s32.totalorder %v1053, 2
        %vm1055 = vcmp.eq.s32.totalorder %v1053, 0
        %v1056 = vxor.u32 %v1050, 2147483648
        %v1057 = vsel %vm1055, %v1049, %v1056
        %vm1058 = vcmp.eq.s32.totalorder %v1053, 2
        %v1059 = vxor.u32 %v1049, 2147483648
        %v1060 = vsel %vm1058, %v1059, %v1050
        %v1061 = vsel %vm1054, %v1057, %v1060
        %v1062 = vsel %vm1051, nan, %v1061
        %v1063 = vlaneseq
        %v1064 = vshrl.u32 %v1063, 7
        %vm1065 = vcmp.lt.s32.totalorder %v1064, 0
        %v1066 = vsub.s32 0, %v1064
        %v1067 = vsel %vm1065, %v1066, %v1064
        %v1068 = vshrl.u32 %v1067, 3
        %v1069 = vand.u32 %v1067, 7
        %v1070 = vsub.s32 0, %v1069
        %v1071 = vsel %vm1065, %v1070, %v1069
        %vm1072 = vcmp.ne.s32.totalorder %v1071, 0
        %vm1073 = vcmp.lt.s32.totalorder %v1071, 0
        %vm1074 = vmand %vm1073, %vm1072
        %v1075 = vadd.s32 %v1071, 8
        %v1076 = vsel %vm1074, %v1075, %v1071
        %vm1077 = vcmp.ne.s32.totalorder %v1076, 0
        %v1078 = vrot.slane %v458, 7
        %v1079 = vsel %vm1077, 1, 0
        %vm1080 = vcmp.eq.s32.totalorder %v1079, 1
        %v1081 = vsel %vm1080, %v1078, 0.0
        %vm1082 = vcmp.ne.s32.totalorder %v1076, 7
        %v1083 = vrot.slane %v458, 1
        %v1084 = vsel %vm1082, 1, 0
        %vm1085 = vcmp.eq.s32.totalorder %v1084, 1
        %v1086 = vsel %vm1085, %v1083, 0.0
        %v1087 = vld [vmem:[%s7] sm:$0x1]
        %v1088 = vlaneseq
        %v1089 = vshrl.u32 %v1088, 7
        %v1090 = vsub.s32 0, %v1089
        %v1091 = vrot.slane %v1087, %v1090
        %v1092 = vmul.f32 %v1081, %v1091
        %v1093 = vld [vmem:[%s7 + $0x1] sm:$0x1]
        %v1094 = vlaneseq
        %v1095 = vshrl.u32 %v1094, 7
        %v1096 = vsub.s32 0, %v1095
        %v1097 = vrot.slane %v1093, %v1096
        %v1098 = vmul.f32 %v458, %v1097
        %v1099 = vadd.f32 %v1092, %v1098
        %v1100 = vld [vmem:[%s7 + $0x2] sm:$0x1]
        %v1101 = vlaneseq
        %v1102 = vshrl.u32 %v1101, 7
        %v1103 = vsub.s32 0, %v1102
        %v1104 = vrot.slane %v1100, %v1103
        %v1105 = vmul.f32 %v1086, %v1104
        %v1106 = vadd.f32 %v1099, %v1105
        %v1107 = vld [vmem:[%s8] sm:$0x1]
        %v1109 = vlaneseq
        %v1110 = vshrl.u32 %v1109, 7
        %v1111 = vsub.s32 0, %v1110
        %v1112 = vrot.slane %v1107, %v1111
        %v1114 = vadd.f32 %v1106, %v1112
        %s1115 = scalar_lea.vmem [#allocation10], 128
        %v1116 = vld [vmem:[%s1115] sm:$0xff]
        %v1117 = vld [vmem:[%s1115 + $0x8] sm:$0xff]
        %v1118 = vld [vmem:[%s1115 + $0x10] sm:$0xff]
        %v1119 = vld [vmem:[%s1115 + $0x18] sm:$0xff]
        %v1120 = vld [vmem:[%s1115 + $0x20] sm:$0xff]
        %v1121 = vld [vmem:[%s1115 + $0x28] sm:$0xff]
        %v1122 = vld [vmem:[%s1115 + $0x30] sm:$0xff]
        %v1123 = vld [vmem:[%s1115 + $0x38] sm:$0xff]
        %v1124 = vld [vmem:[%s1115 + $0x40] sm:$0xff]
        %v1125 = vld [vmem:[%s1115 + $0x48] sm:$0xff]
        %v1126 = vld [vmem:[%s1115 + $0x50] sm:$0xff]
        %v1127 = vld [vmem:[%s1115 + $0x58] sm:$0xff]
        %v1128 = vld [vmem:[%s1115 + $0x60] sm:$0xff]
        %v1129 = vld [vmem:[%s1115 + $0x68] sm:$0xff]
        %v1130 = vld [vmem:[%s1115 + $0x70] sm:$0xff]
        %v1131 = vld [vmem:[%s1115 + $0x78] sm:$0xff]
        %v1132 = vld [vmem:[%s6 + $0x1] sm:$0x1]
        %v1133 = vlaneseq
        %v1134 = vshrl.u32 %v1133, 7
        %v1135 = vsub.s32 0, %v1134
        %v1136 = vrot.slane %v1132, %v1135
        %1137 = vmatprep.subr.mxu0 0.0
        %1138 = vmatpush1.msra.mxu0 %v1116
        %1139 = vmatprep.subr.mxu0 0.0
        %1140 = vmatpush1.msra.mxu0 %v1117
        %1141 = vmatprep.subr.mxu0 0.0
        %1142 = vmatpush1.msra.mxu0 %v1118
        %1143 = vmatprep.subr.mxu0 0.0
        %1144 = vmatpush1.msra.mxu0 %v1119
        %1145 = vmatprep.subr.mxu0 0.0
        %1146 = vmatpush1.msra.mxu0 %v1120
        %1147 = vmatprep.subr.mxu0 0.0
        %1148 = vmatpush1.msra.mxu0 %v1121
        %1149 = vmatprep.subr.mxu0 0.0
        %1150 = vmatpush1.msra.mxu0 %v1122
        %1151 = vmatprep.subr.mxu0 0.0
        %1152 = vmatpush1.msra.mxu0 %v1123
        %1153 = vmatprep.subr.mxu0 0.0
        %1154 = vmatpush1.msra.mxu0 %v1124
        %1155 = vmatprep.subr.mxu0 0.0
        %1156 = vmatpush1.msra.mxu0 %v1125
        %1157 = vmatprep.subr.mxu0 0.0
        %1158 = vmatpush1.msra.mxu0 %v1126
        %1159 = vmatprep.subr.mxu0 0.0
        %1160 = vmatpush1.msra.mxu0 %v1127
        %1161 = vmatprep.subr.mxu0 0.0
        %1162 = vmatpush1.msra.mxu0 %v1128
        %1163 = vmatprep.subr.mxu0 0.0
        %1164 = vmatpush1.msra.mxu0 %v1129
        %1165 = vmatprep.subr.mxu0 0.0
        %1166 = vmatpush1.msra.mxu0 %v1130
        %1167 = vmatprep.subr.mxu0 0.0
        %1168 = vmatpush1.msra.mxu0 %v1131
        %1169 = vmatprep.subr.mxu0 0.0
        %1170 = vmatpush1.msra.mxu0 0.0
        %1171 = vmatprep.subr.mxu0 0.0
        %1172 = vmatpush1.msra.mxu0 0.0
        %1173 = vmatprep.subr.mxu0 0.0
        %1174 = vmatpush1.msra.mxu0 0.0
        %1175 = vmatprep.subr.mxu0 0.0
        %1176 = vmatpush1.msra.mxu0 0.0
        %1177 = vmatprep.subr.mxu0 0.0
        %1178 = vmatpush1.msra.mxu0 0.0
        %1179 = vmatprep.subr.mxu0 0.0
        %1180 = vmatpush1.msra.mxu0 0.0
        %1181 = vmatprep.subr.mxu0 0.0
        %1182 = vmatpush1.msra.mxu0 0.0
        %1183 = vmatprep.subr.mxu0 0.0
        %1184 = vmatpush1.msra.mxu0 0.0
        %1185 = vmatprep.subr.mxu0 0.0
        %1186 = vmatpush1.msra.mxu0 0.0
        %1187 = vmatprep.subr.mxu0 0.0
        %1188 = vmatpush1.msra.mxu0 0.0
        %1189 = vmatprep.subr.mxu0 0.0
        %1190 = vmatpush1.msra.mxu0 0.0
        %1191 = vmatprep.subr.mxu0 0.0
        %1192 = vmatpush1.msra.mxu0 0.0
        %1193 = vmatprep.subr.mxu0 0.0
        %1194 = vmatpush1.msra.mxu0 0.0
        %1195 = vmatprep.subr.mxu0 0.0
        %1196 = vmatpush1.msra.mxu0 0.0
        %1197 = vmatprep.subr.mxu0 0.0
        %1198 = vmatpush1.msra.mxu0 0.0
        %1199 = vmatprep.subr.mxu0 0.0
        %1200 = vmatpush1.msra.mxu0 0.0
        %1201 = vmatprep.mubr.f32.mxu0 0.0
        %1202 = vmatmul.mubr.f32.gmra.mrb[0].mxu0 %v1114
        %v1203 = vpop.f32.mrb[0].mxu0
        %v1204 = vadd.f32 %v1136, %v1203
        %v1205 = vpop.f32.mrb[0].mxu0
        %1206 = vdwg.mxu0
        %v1207 = vand.u32 2147483647, %v1204
        %vm1208 = vcmp.le.f32.partialorder %v1207, 0.7853982
        %vm1209 = vcmp.lt.s32.totalorder %v1204, 0
        %v1210 = vand.u32 %v1204, 2139095040
        %v1211 = vshrl.u32 %v1210, 23
        %v1212 = vsub.s32 %v1211, 127
        %v1213 = vand.u32 2147483647, %v1204
        %v1214 = vand.u32 %v1213, 8388607
        %v1215 = vor.u32 %v1214, 8388608
        %v1216 = vsub.s32 0, %v1215
        %v1217 = vadd.s32 %v1212, 1
        %vm1218 = vcmp.gt.s32.totalorder %v1217, 0
        %v1219 = vsel %vm1218, %v1217, 0
        %v1220 = vshrl.u32 %v1219, 5
        %v1221 = vand.u32 %v1219, 31
        %v1222 = vsub.s32 32, %v1221
        %v1223 = vshrl.u32 683565275, %v1222
        %v1224 = vshll.u32 683565275, %v1221
        %v1225 = vshrl.u32 2475754826, %v1222
        %v1226 = vor.u32 %v1224, %v1225
        %v1227 = vshll.u32 2475754826, %v1221
        %v1228 = vshrl.u32 2131351028, %v1222
        %v1229 = vor.u32 %v1227, %v1228
        %v1230 = vshll.u32 2131351028, %v1221
        %v1231 = vshrl.u32 2102212464, %v1222
        %v1232 = vor.u32 %v1230, %v1231
        %v1233 = vshll.u32 2102212464, %v1221
        %v1234 = vshrl.u32 920167782, %v1222
        %v1235 = vor.u32 %v1233, %v1234
        %v1236 = vshll.u32 920167782, %v1221
        %v1237 = vshrl.u32 1326507024, %v1222
        %v1238 = vor.u32 %v1236, %v1237
        %vm1239 = vcmp.lt.s32.totalorder %v1220, 1
        %vm1240 = vcmp.lt.s32.totalorder %v1220, 2
        %vm1241 = vcmp.lt.s32.totalorder %v1220, 3
        %vm1242 = vcmp.lt.s32.totalorder %v1220, 4
        %v1243 = vsel %vm1239, %v1223, %v1226
        %v1244 = vsel %vm1242, %v1232, 2102212464
        %v1245 = vsel %vm1241, %v1229, %v1244
        %v1246 = vsel %vm1240, %v1243, %v1245
        %v1247 = vsel %vm1239, %v1226, %v1229
        %v1248 = vsel %vm1242, %v1235, 920167782
        %v1249 = vsel %vm1241, %v1232, %v1248
        %v1250 = vsel %vm1240, %v1247, %v1249
        %v1251 = vsel %vm1239, %v1229, %v1232
        %v1252 = vsel %vm1242, %v1238, 1326507024
        %v1253 = vsel %vm1241, %v1235, %v1252
        %v1254 = vsel %vm1240, %v1251, %v1253
        %v1255 = vshll.u32 %v1215, 8
        %v1256 = vmul.u32.u64.compose %v1255, %v1254
        %v1257 = vextract.low.u32 %v1256
        %v1258 = vextract.high.u32 %v1256
        %v1259 = vmul.u32.u64.compose %v1255, %v1250
        %v1260 = vextract.low.u32 %v1259
        %v1261 = vextract.high.u32 %v1259
        %v1262 = vmul.u32 %v1255, %v1246
        %v1263 = vadd.s32 %v1258, %v1260
        %vm1264 = vc.u32 %v1258, %v1260
        %v1265 = vadd.s32 %v1261, 1
        %v1266 = vsel %vm1264, %v1265, %v1261
        %v1267 = vadd.s32 %v1262, %v1266
        %v1268 = vadd.s32 %v1267, 536870912
        %v1269 = vshrl.u32 %v1268, 30
        %v1270 = vshll.u32 %v1269, 30
        %v1271 = vsub.s32 %v1267, %v1270
        %vm1272 = vcmp.lt.s32.totalorder %v1271, 0
        %v1273 = vsub.s32 0, %v1271
        %v1274 = vsel %vm1272, %v1273, %v1271
        %v1275 = vclz %v1274
        %v1276 = vsub.s32 %v1275, 2
        %vm1277 = vcmp.gt.s32.totalorder 0, %v1276
        %v1278 = vsel %vm1277, 0, %v1276
        %v1279 = vsub.s32 32, %v1278
        %v1280 = vshll.u32 %v1271, %v1278
        %v1281 = vshrl.u32 %v1263, %v1279
        %v1282 = vor.u32 %v1280, %v1281
        %v1283 = vsub.s32 4294967266, %v1278
        %v1284 = vadd.s32 %v1283, 127
        %v1285 = vshll.u32 %v1284, 23
        %v1286 = vor.u32 4788187, %v1285
        %v1287 = vand.u32 2147483647, %v1286
        %v1289 = vcvt.s32.f32 %v1282
        %v1290 = vmul.f32 %v1289, %v1287
        %v1291 = vxor.u32 %v1290, 2147483648
        %v1292 = vsel %vm1209, %v1291, %v1290
        %v1293 = vsub.s32 4, %v1269
        %v1294 = vsel %vm1209, %v1293, %v1269
        %v1295 = vsel %vm1208, %v1204, %v1292
        %v1296 = vsel %vm1208, 0, %v1294
        %v1297 = vcosq.f32.pop %v1295
        %v1298 = vsinq.f32.pop %v1295
        %vm1299 = vweird.f32 %v1204
        %v1300 = vadd.s32 %v1296, 3
        %v1301 = vand.u32 %v1300, 3
        %vm1302 = vcmp.lt.s32.totalorder %v1301, 2
        %vm1303 = vcmp.eq.s32.totalorder %v1301, 0
        %v1304 = vxor.u32 %v1298, 2147483648
        %v1305 = vsel %vm1303, %v1297, %v1304
        %vm1306 = vcmp.eq.s32.totalorder %v1301, 2
        %v1307 = vxor.u32 %v1297, 2147483648
        %v1308 = vsel %vm1306, %v1307, %v1298
        %v1309 = vsel %vm1302, %v1305, %v1308
        %v1310 = vsel %vm1299, nan, %v1309
        %1311 = vadd.xlane.f32.xlu0 %v458
        %v1312 = vpop.xlane.xlu0 %1311
        %v1313 = vmul.f32 %v1312, 0.03125
        %v1314 = vmul.f32 %v458, %v458
        %1315 = vadd.xlane.f32.xlu0 %v1314
        %v1316 = vpop.xlane.xlu0 %1315
        %v1317 = vmul.f32 %v1316, 0.03125
        %v1318 = vmul.f32 %v1313, %v1313
        %v1319 = vsub.f32 %v1317, %v1318
        %v1320 = vsub.f32 %v458, %v1313
        %v1321 = vadd.f32 %v1319, 1e-05
        %v1322 = vrsqrt.pop %v1321
        %v1323 = vmul.f32 %v1320, %v1322
        %v1324 = vld [vmem:[%s9] sm:$0x1]
        %v1325 = vlaneseq
        %v1326 = vshrl.u32 %v1325, 7
        %v1327 = vsub.s32 0, %v1326
        %v1328 = vrot.slane %v1324, %v1327
        %v1329 = vmul.f32 %v1323, %v1328
        %v1330 = vld [vmem:[%s10] sm:$0x1]
        %v1331 = vlaneseq
        %v1332 = vshrl.u32 %v1331, 7
        %v1333 = vsub.s32 0, %v1332
        %v1334 = vrot.slane %v1330, %v1333
        %v1335 = vadd.f32 %v1329, %v1334
        %v1336 = vadd.f32 %v1335, %v864
        %v1337 = vadd.f32 %v1336, %v1310
        %v1338 = vadd.f32 %v1337, %v1062
        %1339 = vadd.xlane.f32.xlu0 %v1338
        %v1340 = vpop.xlane.xlu0 %1339
        %v1341 = vmul.f32 %v1340, 0.03125
        %v1342 = vmul.f32 %v1338, %v1338
        %1343 = vadd.xlane.f32.xlu0 %v1342
        %v1344 = vpop.xlane.xlu0 %1343
        %v1345 = vmul.f32 %v1344, 0.03125
        %v1346 = vmul.f32 %v1341, %v1341
        %v1347 = vsub.f32 %v1345, %v1346
        %v1348 = vsub.f32 %v1338, %v1341
        %v1349 = vadd.f32 %v1347, 1e-05
        %v1350 = vrsqrt.pop %v1349
        %v1351 = vmul.f32 %v1348, %v1350
        %v1352 = vld [vmem:[%s9 + $0x1] sm:$0x1]
        %v1353 = vlaneseq
        %v1354 = vshrl.u32 %v1353, 7
        %v1355 = vsub.s32 0, %v1354
        %v1356 = vrot.slane %v1352, %v1355
        %v1357 = vmul.f32 %v1351, %v1356
        %v1358 = vld [vmem:[%s10 + $0x1] sm:$0x1]
        %v1359 = vlaneseq
        %v1360 = vshrl.u32 %v1359, 7
        %v1361 = vsub.s32 0, %v1360
        %v1362 = vrot.slane %v1358, %v1361
        %v1363 = vadd.f32 %v1357, %v1362
        %v1364 = vld [vmem:[#allocation8] sm:$0xff]
        %v1365 = vld [vmem:[#allocation8 + $0x8] sm:$0xff]
        %v1366 = vld [vmem:[#allocation8 + $0x10] sm:$0xff]
        %v1367 = vld [vmem:[#allocation8 + $0x18] sm:$0xff]
        %v1368 = vld [vmem:[#allocation8 + $0x20] sm:$0xff]
        %v1369 = vld [vmem:[#allocation8 + $0x28] sm:$0xff]
        %v1370 = vld [vmem:[#allocation8 + $0x30] sm:$0xff]
        %v1371 = vld [vmem:[#allocation8 + $0x38] sm:$0xff]
        %v1372 = vld [vmem:[#allocation8 + $0x40] sm:$0xff]
        %v1373 = vld [vmem:[#allocation8 + $0x48] sm:$0xff]
        %v1374 = vld [vmem:[#allocation8 + $0x50] sm:$0xff]
        %v1375 = vld [vmem:[#allocation8 + $0x58] sm:$0xff]
        %v1376 = vld [vmem:[#allocation8 + $0x60] sm:$0xff]
        %v1377 = vld [vmem:[#allocation8 + $0x68] sm:$0xff]
        %v1378 = vld [vmem:[#allocation8 + $0x70] sm:$0xff]
        %v1379 = vld [vmem:[#allocation8 + $0x78] sm:$0xff]
        %v1380 = vld [vmem:[#allocation8 + $0x80] sm:$0xff]
        %v1381 = vld [vmem:[#allocation8 + $0x88] sm:$0xff]
        %v1382 = vld [vmem:[#allocation8 + $0x90] sm:$0xff]
        %v1383 = vld [vmem:[#allocation8 + $0x98] sm:$0xff]
        %v1384 = vld [vmem:[#allocation8 + $0xa0] sm:$0xff]
        %v1385 = vld [vmem:[#allocation8 + $0xa8] sm:$0xff]
        %v1386 = vld [vmem:[#allocation8 + $0xb0] sm:$0xff]
        %v1387 = vld [vmem:[#allocation8 + $0xb8] sm:$0xff]
        %v1388 = vld [vmem:[#allocation8 + $0xc0] sm:$0xff]
        %v1389 = vld [vmem:[#allocation8 + $0xc8] sm:$0xff]
        %v1390 = vld [vmem:[#allocation8 + $0xd0] sm:$0xff]
        %v1391 = vld [vmem:[#allocation8 + $0xd8] sm:$0xff]
        %v1392 = vld [vmem:[#allocation8 + $0xe0] sm:$0xff]
        %v1393 = vld [vmem:[#allocation8 + $0xe8] sm:$0xff]
        %v1394 = vld [vmem:[#allocation8 + $0xf0] sm:$0xff]
        %v1395 = vld [vmem:[#allocation8 + $0xf8] sm:$0xff]
        %v1396 = vld [vmem:[%s4] sm:$0x3]
        %v1398 = vlaneseq
        %v1399 = vshrl.u32 %v1398, 7
        %v1400 = vsub.s32 0, %v1399
        %v1401 = vrot.slane %v1396, %v1400
        %v1402 = vlaneseq
        %v1403 = vshrl.u32 %v1402, 7
        %v1404 = vsub.s32 1, %v1403
        %v1405 = vrot.slane %v1396, %v1404
        %1408 = vmatprep.subr.mxu0 %v1365
        %1409 = vmatpush1.msra.mxu0 %v1364
        %1410 = vmatprep.subr.mxu0 %v1367
        %1411 = vmatpush1.msra.mxu0 %v1366
        %1412 = vmatprep.subr.mxu0 %v1369
        %1413 = vmatpush1.msra.mxu0 %v1368
        %1414 = vmatprep.subr.mxu0 %v1371
        %1415 = vmatpush1.msra.mxu0 %v1370
        %1416 = vmatprep.subr.mxu0 %v1373
        %1417 = vmatpush1.msra.mxu0 %v1372
        %1418 = vmatprep.subr.mxu0 %v1375
        %1419 = vmatpush1.msra.mxu0 %v1374
        %1420 = vmatprep.subr.mxu0 %v1377
        %1421 = vmatpush1.msra.mxu0 %v1376
        %1422 = vmatprep.subr.mxu0 %v1379
        %1423 = vmatpush1.msra.mxu0 %v1378
        %1424 = vmatprep.subr.mxu0 %v1381
        %1425 = vmatpush1.msra.mxu0 %v1380
        %1426 = vmatprep.subr.mxu0 %v1383
        %1427 = vmatpush1.msra.mxu0 %v1382
        %1428 = vmatprep.subr.mxu0 %v1385
        %1429 = vmatpush1.msra.mxu0 %v1384
        %1430 = vmatprep.subr.mxu0 %v1387
        %1431 = vmatpush1.msra.mxu0 %v1386
        %1432 = vmatprep.subr.mxu0 %v1389
        %1433 = vmatpush1.msra.mxu0 %v1388
        %1434 = vmatprep.subr.mxu0 %v1391
        %1435 = vmatpush1.msra.mxu0 %v1390
        %1436 = vmatprep.subr.mxu0 %v1393
        %1437 = vmatpush1.msra.mxu0 %v1392
        %1438 = vmatprep.subr.mxu0 %v1395
        %1439 = vmatpush1.msra.mxu0 %v1394
        %1440 = vmatprep.subr.mxu0 0.0
        %1441 = vmatpush1.msra.mxu0 0.0
        %1442 = vmatprep.subr.mxu0 0.0
        %1443 = vmatpush1.msra.mxu0 0.0
        %1444 = vmatprep.subr.mxu0 0.0
        %1445 = vmatpush1.msra.mxu0 0.0
        %1446 = vmatprep.subr.mxu0 0.0
        %1447 = vmatpush1.msra.mxu0 0.0
        %1448 = vmatprep.subr.mxu0 0.0
        %1449 = vmatpush1.msra.mxu0 0.0
        %1450 = vmatprep.subr.mxu0 0.0
        %1451 = vmatpush1.msra.mxu0 0.0
        %1452 = vmatprep.subr.mxu0 0.0
        %1453 = vmatpush1.msra.mxu0 0.0
        %1454 = vmatprep.subr.mxu0 0.0
        %1455 = vmatpush1.msra.mxu0 0.0
        %1456 = vmatprep.subr.mxu0 0.0
        %1457 = vmatpush1.msra.mxu0 0.0
        %1458 = vmatprep.subr.mxu0 0.0
        %1459 = vmatpush1.msra.mxu0 0.0
        %1460 = vmatprep.subr.mxu0 0.0
        %1461 = vmatpush1.msra.mxu0 0.0
        %1462 = vmatprep.subr.mxu0 0.0
        %1463 = vmatpush1.msra.mxu0 0.0
        %1464 = vmatprep.subr.mxu0 0.0
        %1465 = vmatpush1.msra.mxu0 0.0
        %1466 = vmatprep.subr.mxu0 0.0
        %1467 = vmatpush1.msra.mxu0 0.0
        %1468 = vmatprep.subr.mxu0 0.0
        %1469 = vmatpush1.msra.mxu0 0.0
        %1470 = vmatprep.subr.mxu0 0.0
        %1471 = vmatpush1.msra.mxu0 0.0
        %1472 = vmatprep.mubr.f32.mxu0 0.0
        %1473 = vmatmul.mubr.f32.gmra.mrb[0].mxu0 %v1363
        %v1474 = vpop.f32.mrb[0].mxu0
        %v1475 = vadd.f32 %v1401, %v1474
        %v1476 = vpop.f32.mrb[0].mxu0
        %v1477 = vadd.f32 %v1405, %v1476
        %1478 = vdwg.mxu0
        %v1479 = vand.u32 2147483647, %v1475
        %vm1480 = vcmp.le.f32.partialorder %v1479, 0.7853982
        %vm1481 = vcmp.lt.s32.totalorder %v1475, 0
        %v1482 = vand.u32 %v1475, 2139095040
        %v1483 = vshrl.u32 %v1482, 23
        %v1484 = vsub.s32 %v1483, 127
        %v1485 = vand.u32 2147483647, %v1475
        %v1486 = vand.u32 %v1485, 8388607
        %v1487 = vor.u32 %v1486, 8388608
        %v1488 = vsub.s32 0, %v1487
        %v1489 = vadd.s32 %v1484, 1
        %vm1490 = vcmp.gt.s32.totalorder %v1489, 0
        %v1491 = vsel %vm1490, %v1489, 0
        %v1492 = vshrl.u32 %v1491, 5
        %v1493 = vand.u32 %v1491, 31
        %v1494 = vsub.s32 32, %v1493
        %v1495 = vshrl.u32 683565275, %v1494
        %v1496 = vshll.u32 683565275, %v1493
        %v1497 = vshrl.u32 2475754826, %v1494
        %v1498 = vor.u32 %v1496, %v1497
        %v1499 = vshll.u32 2475754826, %v1493
        %v1500 = vshrl.u32 2131351028, %v1494
        %v1501 = vor.u32 %v1499, %v1500
        %v1502 = vshll.u32 2131351028, %v1493
        %v1503 = vshrl.u32 2102212464, %v1494
        %v1504 = vor.u32 %v1502, %v1503
        %v1505 = vshll.u32 2102212464, %v1493
        %v1506 = vshrl.u32 920167782, %v1494
        %v1507 = vor.u32 %v1505, %v1506
        %v1508 = vshll.u32 920167782, %v1493
        %v1509 = vshrl.u32 1326507024, %v1494
        %v1510 = vor.u32 %v1508, %v1509
        %vm1511 = vcmp.lt.s32.totalorder %v1492, 1
        %vm1512 = vcmp.lt.s32.totalorder %v1492, 2
        %vm1513 = vcmp.lt.s32.totalorder %v1492, 3
        %vm1514 = vcmp.lt.s32.totalorder %v1492, 4
        %v1515 = vsel %vm1511, %v1495, %v1498
        %v1516 = vsel %vm1514, %v1504, 2102212464
        %v1517 = vsel %vm1513, %v1501, %v1516
        %v1518 = vsel %vm1512, %v1515, %v1517
        %v1519 = vsel %vm1511, %v1498, %v1501
        %v1520 = vsel %vm1514, %v1507, 920167782
        %v1521 = vsel %vm1513, %v1504, %v1520
        %v1522 = vsel %vm1512, %v1519, %v1521
        %v1523 = vsel %vm1511, %v1501, %v1504
        %v1524 = vsel %vm1514, %v1510, 1326507024
        %v1525 = vsel %vm1513, %v1507, %v1524
        %v1526 = vsel %vm1512, %v1523, %v1525
        %v1527 = vshll.u32 %v1487, 8
        %v1528 = vmul.u32.u64.compose %v1527, %v1526
        %v1529 = vextract.low.u32 %v1528
        %v1530 = vextract.high.u32 %v1528
        %v1531 = vmul.u32.u64.compose %v1527, %v1522
        %v1532 = vextract.low.u32 %v1531
        %v1533 = vextract.high.u32 %v1531
        %v1534 = vmul.u32 %v1527, %v1518
        %v1535 = vadd.s32 %v1530, %v1532
        %vm1536 = vc.u32 %v1530, %v1532
        %v1537 = vadd.s32 %v1533, 1
        %v1538 = vsel %vm1536, %v1537, %v1533
        %v1539 = vadd.s32 %v1534, %v1538
        %v1540 = vadd.s32 %v1539, 536870912
        %v1541 = vshrl.u32 %v1540, 30
        %v1542 = vshll.u32 %v1541, 30
        %v1543 = vsub.s32 %v1539, %v1542
        %vm1544 = vcmp.lt.s32.totalorder %v1543, 0
        %v1545 = vsub.s32 0, %v1543
        %v1546 = vsel %vm1544, %v1545, %v1543
        %v1547 = vclz %v1546
        %v1548 = vsub.s32 %v1547, 2
        %vm1549 = vcmp.gt.s32.totalorder 0, %v1548
        %v1550 = vsel %vm1549, 0, %v1548
        %v1551 = vsub.s32 32, %v1550
        %v1552 = vshll.u32 %v1543, %v1550
        %v1553 = vshrl.u32 %v1535, %v1551
        %v1554 = vor.u32 %v1552, %v1553
        %v1555 = vsub.s32 4294967266, %v1550
        %v1556 = vadd.s32 %v1555, 127
        %v1557 = vshll.u32 %v1556, 23
        %v1558 = vor.u32 4788187, %v1557
        %v1559 = vand.u32 2147483647, %v1558
        %v1561 = vcvt.s32.f32 %v1554
        %v1562 = vmul.f32 %v1561, %v1559
        %v1563 = vxor.u32 %v1562, 2147483648
        %v1564 = vsel %vm1481, %v1563, %v1562
        %v1565 = vsub.s32 4, %v1541
        %v1566 = vsel %vm1481, %v1565, %v1541
        %v1567 = vsel %vm1480, %v1475, %v1564
        %v1568 = vsel %vm1480, 0, %v1566
        %v1569 = vcosq.f32.pop %v1567
        %v1570 = vsinq.f32.pop %v1567
        %vm1571 = vweird.f32 %v1475
        %v1572 = vadd.s32 %v1568, 3
        %v1573 = vand.u32 %v1572, 3
        %vm1574 = vcmp.lt.s32.totalorder %v1573, 2
        %vm1575 = vcmp.eq.s32.totalorder %v1573, 0
        %v1576 = vxor.u32 %v1570, 2147483648
        %v1577 = vsel %vm1575, %v1569, %v1576
        %vm1578 = vcmp.eq.s32.totalorder %v1573, 2
        %v1579 = vxor.u32 %v1569, 2147483648
        %v1580 = vsel %vm1578, %v1579, %v1570
        %v1581 = vsel %vm1574, %v1577, %v1580
        %v1582 = vsel %vm1571, nan, %v1581
        %s1583 = scalar_lea.vmem [#allocation10], 384
        %v1584 = vld [vmem:[%s1583] sm:$0xff]
        %v1585 = vld [vmem:[%s1583 + $0x8] sm:$0xff]
        %v1586 = vld [vmem:[%s1583 + $0x10] sm:$0xff]
        %v1587 = vld [vmem:[%s1583 + $0x18] sm:$0xff]
        %v1588 = vld [vmem:[%s1583 + $0x20] sm:$0xff]
        %v1589 = vld [vmem:[%s1583 + $0x28] sm:$0xff]
        %v1590 = vld [vmem:[%s1583 + $0x30] sm:$0xff]
        %v1591 = vld [vmem:[%s1583 + $0x38] sm:$0xff]
        %v1592 = vld [vmem:[%s1583 + $0x40] sm:$0xff]
        %v1593 = vld [vmem:[%s1583 + $0x48] sm:$0xff]
        %v1594 = vld [vmem:[%s1583 + $0x50] sm:$0xff]
        %v1595 = vld [vmem:[%s1583 + $0x58] sm:$0xff]
        %v1596 = vld [vmem:[%s1583 + $0x60] sm:$0xff]
        %v1597 = vld [vmem:[%s1583 + $0x68] sm:$0xff]
        %v1598 = vld [vmem:[%s1583 + $0x70] sm:$0xff]
        %v1599 = vld [vmem:[%s1583 + $0x78] sm:$0xff]
        %v1600 = vld [vmem:[%s6 + $0x3] sm:$0x1]
        %v1601 = vlaneseq
        %v1602 = vshrl.u32 %v1601, 7
        %v1603 = vsub.s32 0, %v1602
        %v1604 = vrot.slane %v1600, %v1603
        %1605 = vmatprep.subr.mxu0 0.0
        %1606 = vmatpush1.msra.mxu0 %v1584
        %1607 = vmatprep.subr.mxu0 0.0
        %1608 = vmatpush1.msra.mxu0 %v1585
        %1609 = vmatprep.subr.mxu0 0.0
        %1610 = vmatpush1.msra.mxu0 %v1586
        %1611 = vmatprep.subr.mxu0 0.0
        %1612 = vmatpush1.msra.mxu0 %v1587
        %1613 = vmatprep.subr.mxu0 0.0
        %1614 = vmatpush1.msra.mxu0 %v1588
        %1615 = vmatprep.subr.mxu0 0.0
        %1616 = vmatpush1.msra.mxu0 %v1589
        %1617 = vmatprep.subr.mxu0 0.0
        %1618 = vmatpush1.msra.mxu0 %v1590
        %1619 = vmatprep.subr.mxu0 0.0
        %1620 = vmatpush1.msra.mxu0 %v1591
        %1621 = vmatprep.subr.mxu0 0.0
        %1622 = vmatpush1.msra.mxu0 %v1592
        %1623 = vmatprep.subr.mxu0 0.0
        %1624 = vmatpush1.msra.mxu0 %v1593
        %1625 = vmatprep.subr.mxu0 0.0
        %1626 = vmatpush1.msra.mxu0 %v1594
        %1627 = vmatprep.subr.mxu0 0.0
        %1628 = vmatpush1.msra.mxu0 %v1595
        %1629 = vmatprep.subr.mxu0 0.0
        %1630 = vmatpush1.msra.mxu0 %v1596
        %1631 = vmatprep.subr.mxu0 0.0
        %1632 = vmatpush1.msra.mxu0 %v1597
        %1633 = vmatprep.subr.mxu0 0.0
        %1634 = vmatpush1.msra.mxu0 %v1598
        %1635 = vmatprep.subr.mxu0 0.0
        %1636 = vmatpush1.msra.mxu0 %v1599
        %1637 = vmatprep.subr.mxu0 0.0
        %1638 = vmatpush1.msra.mxu0 0.0
        %1639 = vmatprep.subr.mxu0 0.0
        %1640 = vmatpush1.msra.mxu0 0.0
        %1641 = vmatprep.subr.mxu0 0.0
        %1642 = vmatpush1.msra.mxu0 0.0
        %1643 = vmatprep.subr.mxu0 0.0
        %1644 = vmatpush1.msra.mxu0 0.0
        %1645 = vmatprep.subr.mxu0 0.0
        %1646 = vmatpush1.msra.mxu0 0.0
        %1647 = vmatprep.subr.mxu0 0.0
        %1648 = vmatpush1.msra.mxu0 0.0
        %1649 = vmatprep.subr.mxu0 0.0
        %1650 = vmatpush1.msra.mxu0 0.0
        %1651 = vmatprep.subr.mxu0 0.0
        %1652 = vmatpush1.msra.mxu0 0.0
        %1653 = vmatprep.subr.mxu0 0.0
        %1654 = vmatpush1.msra.mxu0 0.0
        %1655 = vmatprep.subr.mxu0 0.0
        %1656 = vmatpush1.msra.mxu0 0.0
        %1657 = vmatprep.subr.mxu0 0.0
        %1658 = vmatpush1.msra.mxu0 0.0
        %1659 = vmatprep.subr.mxu0 0.0
        %1660 = vmatpush1.msra.mxu0 0.0
        %1661 = vmatprep.subr.mxu0 0.0
        %1662 = vmatpush1.msra.mxu0 0.0
        %1663 = vmatprep.subr.mxu0 0.0
        %1664 = vmatpush1.msra.mxu0 0.0
        %1665 = vmatprep.subr.mxu0 0.0
        %1666 = vmatpush1.msra.mxu0 0.0
        %1667 = vmatprep.subr.mxu0 0.0
        %1668 = vmatpush1.msra.mxu0 0.0
        %1669 = vmatprep.mubr.f32.mxu0 0.0
        %1670 = vmatmul.mubr.f32.gmra.mrb[0].mxu0 %v1582
        %v1671 = vpop.f32.mrb[0].mxu0
        %v1672 = vadd.f32 %v1604, %v1671
        %v1673 = vpop.f32.mrb[0].mxu0
        %1674 = vdwg.mxu0
        %s1675 = scalar_lea.vmem [#allocation10], 512
        %v1676 = vld [vmem:[%s1675] sm:$0xff]
        %v1677 = vld [vmem:[%s1675 + $0x8] sm:$0xff]
        %v1678 = vld [vmem:[%s1675 + $0x10] sm:$0xff]
        %v1679 = vld [vmem:[%s1675 + $0x18] sm:$0xff]
        %v1680 = vld [vmem:[%s1675 + $0x20] sm:$0xff]
        %v1681 = vld [vmem:[%s1675 + $0x28] sm:$0xff]
        %v1682 = vld [vmem:[%s1675 + $0x30] sm:$0xff]
        %v1683 = vld [vmem:[%s1675 + $0x38] sm:$0xff]
        %v1684 = vld [vmem:[%s1675 + $0x40] sm:$0xff]
        %v1685 = vld [vmem:[%s1675 + $0x48] sm:$0xff]
        %v1686 = vld [vmem:[%s1675 + $0x50] sm:$0xff]
        %v1687 = vld [vmem:[%s1675 + $0x58] sm:$0xff]
        %v1688 = vld [vmem:[%s1675 + $0x60] sm:$0xff]
        %v1689 = vld [vmem:[%s1675 + $0x68] sm:$0xff]
        %v1690 = vld [vmem:[%s1675 + $0x70] sm:$0xff]
        %v1691 = vld [vmem:[%s1675 + $0x78] sm:$0xff]
        %v1692 = vld [vmem:[%s6 + $0x4] sm:$0x1]
        %v1693 = vlaneseq
        %v1694 = vshrl.u32 %v1693, 7
        %v1695 = vsub.s32 0, %v1694
        %v1696 = vrot.slane %v1692, %v1695
        %1697 = vmatprep.subr.mxu0 0.0
        %1698 = vmatpush1.msra.mxu0 %v1676
        %1699 = vmatprep.subr.mxu0 0.0
        %1700 = vmatpush1.msra.mxu0 %v1677
        %1701 = vmatprep.subr.mxu0 0.0
        %1702 = vmatpush1.msra.mxu0 %v1678
        %1703 = vmatprep.subr.mxu0 0.0
        %1704 = vmatpush1.msra.mxu0 %v1679
        %1705 = vmatprep.subr.mxu0 0.0
        %1706 = vmatpush1.msra.mxu0 %v1680
        %1707 = vmatprep.subr.mxu0 0.0
        %1708 = vmatpush1.msra.mxu0 %v1681
        %1709 = vmatprep.subr.mxu0 0.0
        %1710 = vmatpush1.msra.mxu0 %v1682
        %1711 = vmatprep.subr.mxu0 0.0
        %1712 = vmatpush1.msra.mxu0 %v1683
        %1713 = vmatprep.subr.mxu0 0.0
        %1714 = vmatpush1.msra.mxu0 %v1684
        %1715 = vmatprep.subr.mxu0 0.0
        %1716 = vmatpush1.msra.mxu0 %v1685
        %1717 = vmatprep.subr.mxu0 0.0
        %1718 = vmatpush1.msra.mxu0 %v1686
        %1719 = vmatprep.subr.mxu0 0.0
        %1720 = vmatpush1.msra.mxu0 %v1687
        %1721 = vmatprep.subr.mxu0 0.0
        %1722 = vmatpush1.msra.mxu0 %v1688
        %1723 = vmatprep.subr.mxu0 0.0
        %1724 = vmatpush1.msra.mxu0 %v1689
        %1725 = vmatprep.subr.mxu0 0.0
        %1726 = vmatpush1.msra.mxu0 %v1690
        %1727 = vmatprep.subr.mxu0 0.0
        %1728 = vmatpush1.msra.mxu0 %v1691
        %1729 = vmatprep.subr.mxu0 0.0
        %1730 = vmatpush1.msra.mxu0 0.0
        %1731 = vmatprep.subr.mxu0 0.0
        %1732 = vmatpush1.msra.mxu0 0.0
        %1733 = vmatprep.subr.mxu0 0.0
        %1734 = vmatpush1.msra.mxu0 0.0
        %1735 = vmatprep.subr.mxu0 0.0
        %1736 = vmatpush1.msra.mxu0 0.0
        %1737 = vmatprep.subr.mxu0 0.0
        %1738 = vmatpush1.msra.mxu0 0.0
        %1739 = vmatprep.subr.mxu0 0.0
        %1740 = vmatpush1.msra.mxu0 0.0
        %1741 = vmatprep.subr.mxu0 0.0
        %1742 = vmatpush1.msra.mxu0 0.0
        %1743 = vmatprep.subr.mxu0 0.0
        %1744 = vmatpush1.msra.mxu0 0.0
        %1745 = vmatprep.subr.mxu0 0.0
        %1746 = vmatpush1.msra.mxu0 0.0
        %1747 = vmatprep.subr.mxu0 0.0
        %1748 = vmatpush1.msra.mxu0 0.0
        %1749 = vmatprep.subr.mxu0 0.0
        %1750 = vmatpush1.msra.mxu0 0.0
        %1751 = vmatprep.subr.mxu0 0.0
        %1752 = vmatpush1.msra.mxu0 0.0
        %1753 = vmatprep.subr.mxu0 0.0
        %1754 = vmatpush1.msra.mxu0 0.0
        %1755 = vmatprep.subr.mxu0 0.0
        %1756 = vmatpush1.msra.mxu0 0.0
        %1757 = vmatprep.subr.mxu0 0.0
        %1758 = vmatpush1.msra.mxu0 0.0
        %1759 = vmatprep.subr.mxu0 0.0
        %1760 = vmatpush1.msra.mxu0 0.0
        %1761 = vmatprep.mubr.f32.mxu0 0.0
        %1762 = vmatmul.mubr.f32.gmra.mrb[0].mxu0 %v1477
        %v1763 = vpop.f32.mrb[0].mxu0
        %v1764 = vadd.f32 %v1696, %v1763
        %v1765 = vpop.f32.mrb[0].mxu0
        %1766 = vdwg.mxu0
        %v1767 = vand.u32 2147483647, %v1764
        %vm1768 = vcmp.le.f32.partialorder %v1767, 0.7853982
        %vm1769 = vcmp.lt.s32.totalorder %v1764, 0
        %v1770 = vand.u32 %v1764, 2139095040
        %v1771 = vshrl.u32 %v1770, 23
        %v1772 = vsub.s32 %v1771, 127
        %v1773 = vand.u32 2147483647, %v1764
        %v1774 = vand.u32 %v1773, 8388607
        %v1775 = vor.u32 %v1774, 8388608
        %v1776 = vsub.s32 0, %v1775
        %v1777 = vadd.s32 %v1772, 1
        %vm1778 = vcmp.gt.s32.totalorder %v1777, 0
        %v1779 = vsel %vm1778, %v1777, 0
        %v1780 = vshrl.u32 %v1779, 5
        %v1781 = vand.u32 %v1779, 31
        %v1782 = vsub.s32 32, %v1781
        %v1783 = vshrl.u32 683565275, %v1782
        %v1784 = vshll.u32 683565275, %v1781
        %v1785 = vshrl.u32 2475754826, %v1782
        %v1786 = vor.u32 %v1784, %v1785
        %v1787 = vshll.u32 2475754826, %v1781
        %v1788 = vshrl.u32 2131351028, %v1782
        %v1789 = vor.u32 %v1787, %v1788
        %v1790 = vshll.u32 2131351028, %v1781
        %v1791 = vshrl.u32 2102212464, %v1782
        %v1792 = vor.u32 %v1790, %v1791
        %v1793 = vshll.u32 2102212464, %v1781
        %v1794 = vshrl.u32 920167782, %v1782
        %v1795 = vor.u32 %v1793, %v1794
        %v1796 = vshll.u32 920167782, %v1781
        %v1797 = vshrl.u32 1326507024, %v1782
        %v1798 = vor.u32 %v1796, %v1797
        %vm1799 = vcmp.lt.s32.totalorder %v1780, 1
        %vm1800 = vcmp.lt.s32.totalorder %v1780, 2
        %vm1801 = vcmp.lt.s32.totalorder %v1780, 3
        %vm1802 = vcmp.lt.s32.totalorder %v1780, 4
        %v1803 = vsel %vm1799, %v1783, %v1786
        %v1804 = vsel %vm1802, %v1792, 2102212464
        %v1805 = vsel %vm1801, %v1789, %v1804
        %v1806 = vsel %vm1800, %v1803, %v1805
        %v1807 = vsel %vm1799, %v1786, %v1789
        %v1808 = vsel %vm1802, %v1795, 920167782
        %v1809 = vsel %vm1801, %v1792, %v1808
        %v1810 = vsel %vm1800, %v1807, %v1809
        %v1811 = vsel %vm1799, %v1789, %v1792
        %v1812 = vsel %vm1802, %v1798, 1326507024
        %v1813 = vsel %vm1801, %v1795, %v1812
        %v1814 = vsel %vm1800, %v1811, %v1813
        %v1815 = vshll.u32 %v1775, 8
        %v1816 = vmul.u32.u64.compose %v1815, %v1814
        %v1817 = vextract.low.u32 %v1816
        %v1818 = vextract.high.u32 %v1816
        %v1819 = vmul.u32.u64.compose %v1815, %v1810
        %v1820 = vextract.low.u32 %v1819
        %v1821 = vextract.high.u32 %v1819
        %v1822 = vmul.u32 %v1815, %v1806
        %v1823 = vadd.s32 %v1818, %v1820
        %vm1824 = vc.u32 %v1818, %v1820
        %v1825 = vadd.s32 %v1821, 1
        %v1826 = vsel %vm1824, %v1825, %v1821
        %v1827 = vadd.s32 %v1822, %v1826
        %v1828 = vadd.s32 %v1827, 536870912
        %v1829 = vshrl.u32 %v1828, 30
        %v1830 = vshll.u32 %v1829, 30
        %v1831 = vsub.s32 %v1827, %v1830
        %vm1832 = vcmp.lt.s32.totalorder %v1831, 0
        %v1833 = vsub.s32 0, %v1831
        %v1834 = vsel %vm1832, %v1833, %v1831
        %v1835 = vclz %v1834
        %v1836 = vsub.s32 %v1835, 2
        %vm1837 = vcmp.gt.s32.totalorder 0, %v1836
        %v1838 = vsel %vm1837, 0, %v1836
        %v1839 = vsub.s32 32, %v1838
        %v1840 = vshll.u32 %v1831, %v1838
        %v1841 = vshrl.u32 %v1823, %v1839
        %v1842 = vor.u32 %v1840, %v1841
        %v1843 = vsub.s32 4294967266, %v1838
        %v1844 = vadd.s32 %v1843, 127
        %v1845 = vshll.u32 %v1844, 23
        %v1846 = vor.u32 4788187, %v1845
        %v1847 = vand.u32 2147483647, %v1846
        %v1849 = vcvt.s32.f32 %v1842
        %v1850 = vmul.f32 %v1849, %v1847
        %v1851 = vxor.u32 %v1850, 2147483648
        %v1852 = vsel %vm1769, %v1851, %v1850
        %v1853 = vsub.s32 4, %v1829
        %v1854 = vsel %vm1769, %v1853, %v1829
        %v1855 = vsel %vm1768, %v1764, %v1852
        %v1856 = vsel %vm1768, 0, %v1854
        %v1857 = vcosq.f32.pop %v1855
        %v1858 = vsinq.f32.pop %v1855
        %vm1859 = vweird.f32 %v1764
        %v1860 = vadd.s32 %v1856, 3
        %v1861 = vand.u32 %v1860, 3
        %vm1862 = vcmp.lt.s32.totalorder %v1861, 2
        %vm1863 = vcmp.eq.s32.totalorder %v1861, 0
        %v1864 = vxor.u32 %v1858, 2147483648
        %v1865 = vsel %vm1863, %v1857, %v1864
        %vm1866 = vcmp.eq.s32.totalorder %v1861, 2
        %v1867 = vxor.u32 %v1857, 2147483648
        %v1868 = vsel %vm1866, %v1867, %v1858
        %v1869 = vsel %vm1862, %v1865, %v1868
        %v1870 = vsel %vm1859, nan, %v1869
        %v1871 = vadd.f32 %v1363, %v1672
        %v1872 = vadd.f32 %v1871, %v1870
        %1873 = vadd.xlane.f32.xlu0 %v1872
        %v1874 = vpop.xlane.xlu0 %1873
        %v1875 = vmul.f32 %v1874, 0.03125
        %v1876 = vmul.f32 %v1872, %v1872
        %1877 = vadd.xlane.f32.xlu0 %v1876
        %v1878 = vpop.xlane.xlu0 %1877
        %v1879 = vmul.f32 %v1878, 0.03125
        %v1880 = vmul.f32 %v1875, %v1875
        %v1881 = vsub.f32 %v1879, %v1880
        %v1882 = vsub.f32 %v1872, %v1875
        %v1883 = vadd.f32 %v1881, 1e-05
        %v1884 = vrsqrt.pop %v1883
        %v1885 = vmul.f32 %v1882, %v1884
        %v1886 = vld [vmem:[%s9 + $0x2] sm:$0x1]
        %v1887 = vlaneseq
        %v1888 = vshrl.u32 %v1887, 7
        %v1889 = vsub.s32 0, %v1888
        %v1890 = vrot.slane %v1886, %v1889
        %v1891 = vmul.f32 %v1885, %v1890
        %v1892 = vld [vmem:[%s10 + $0x2] sm:$0x1]
        %v1893 = vlaneseq
        %v1894 = vshrl.u32 %v1893, 7
        %v1895 = vsub.s32 0, %v1894
        %v1896 = vrot.slane %v1892, %v1895
        %v1897 = vadd.f32 %v1891, %v1896
        %1898 = vst [vmem:[%s457] sm:$0xff] %v1897
        %s1899 = sand.u32 %s274, 1
        %s1900 = scalar_lea.sflag [#allocation4], %s1899
        %s1901 = sand.u32 %s274, 1
        %s1902 = smul.addr %s1901, 8
        %s1903 = scalar_lea.vmem [#allocation11], %s1902
        // Predicated region
        $region85: #{tpu_custom_call.1} parent=63 // pred_check
          %p1904 = pneg %p284
        $region86: #{tpu_custom_call.1} parent=63 // pred_check_branch
          %1906 = sbr.rel (%p1904) target = $region88
        $region87: #{tpu_custom_call.1} parent=63 // pred_region
          %s1908 = ssub.s32 128, 128
          %1909 = vsyncadd %s1900, %s1908
          %s1910 = smul.addr %s30, 128
          %s1911 = scalar_lea.hbm %s11, %s1910
          %s1913 = sshll.u32 %s1903, 4
          %s1914 = int_to_ptr.vmem [resolvable:$true] %s1913
          %1916 = dma.vmem_to_hbm [thread:$0]  %s1914, 128, %s1911, %s1900
        $region88: #{tpu_custom_call.1} parent=63 // pred_fallthru
          _
      $region64: #{tpu_custom_call.1} parent=5 // pred_fallthru
        _
      %p1917 = scmp.le.s32.totalorder 2, %s25
      // Predicated region
      $region89: #{tpu_custom_call.1} parent=5 // pred_check
        %p1918 = pneg %p1917
      $region90: #{tpu_custom_call.1} parent=5 // pred_check_branch
        %1920 = sbr.rel (%p1918) target = $region92
      $region91: #{tpu_custom_call.1} parent=5 // pred_region
        %s1921 = ssub.s32 %s25, 2
        // Predicated region
        $region93: #{tpu_custom_call.1} parent=91 // pred_check
          %p1922 = pneg %p290
        $region94: #{tpu_custom_call.1} parent=91 // pred_check_branch
          %1924 = sbr.rel (%p1922) target = $region96
        $region95: #{tpu_custom_call.1} parent=91 // pred_region
          %s1925 = sand.u32 %s275, 1
          %s1926 = scalar_lea.sflag [#allocation4], %s1925
          %s1927 = sand.u32 %s275, 1
          %s1928 = smul.addr %s1927, 8
          %s1929 = scalar_lea.vmem [#allocation11], %s1928
          %1930 = dma.done %s1926, 128
        $region96: #{tpu_custom_call.1} parent=91 // pred_fallthru
          _
      $region92: #{tpu_custom_call.1} parent=5 // pred_fallthru
        _
    $region6: #{tpu_custom_call.1} parent=1 // loop_footer
      %s29 = sadd.s32 1, %s25
    $region7: #{tpu_custom_call.1} parent=1 // loop_footer_branch
      %24 = sbr.rel target = $region3
    $region8: #{tpu_custom_call.1} parent=1 // loop_exit
      _
    %1931 = vsyncpa [#allocation3], 1
    %s1932 = scalar_lea.sflag [#allocation3], 1
    %1933 = vsyncpa %s1932, 1
    %1934 = vsyncpa [#allocation6], 1
    %1935 = vsyncpa [#allocation9], 1
    %1936 = vsyncpa [#allocation4], 1
    %s1937 = scalar_lea.sflag [#allocation4], 1
    %1938 = vsyncpa %s1937, 1

</llo_original>
